<compile_context>
chip_gen: v5e
topology: v5e:2x2
jax: 0.10.0
libtpu: 0.0.40
codegen_flags: <defaults>
</compile_context>

<pallas_src>
import functools

import jax
import jax.numpy as jnp
from jax import lax
from jax.experimental import pallas as pl
from jax.experimental.pallas import tpu as pltpu


def _shift_cols(v, kx):
    """Column tap view with conv zero-padding.

    v: (rows, W, C).  Returns t with t[:, x, :] = v[:, x + kx - 1, :] and zeros where
    x + kx - 1 falls outside [0, W-1].  kx == 1 is the identity (no copy).
    """
    if kx == 1:
        return v
    zero = jnp.zeros_like(v[:, :1, :])
    if kx == 0:                                   # needs column x-1
        return jnp.concatenate([zero, v[:, :-1, :]], axis=1)
    return jnp.concatenate([v[:, 1:, :], zero], axis=1)   # kx == 2: column x+1


def _sa_kernel(x_ref, w1_ref, scale_ref, shift_ref, w2_ref, b2_ref,
               out_ref, out1_ref, *, W, BAND):
    """Fused SA forward for one (batch, row-band) grid step.

    x_ref    : (1, H+4, W, Cin)  bf16  whole image, 2 zero rows of padding top/bottom
    w1_ref   : (9, Cin, Cmid)    bf16  conv1 weight, tap-major (ky*3+kx)
    scale_ref: (1, Cmid)         f32   folded BN scale (gamma / sqrt(var+eps))
    shift_ref: (1, Cmid)         f32   folded BN shift ((b1-mean)*scale + beta)
    w2_ref   : (9, Cmid, Cmid)   bf16  conv2 weight (second-half out channels only)
    b2_ref   : (1, Cmid)         f32   conv2 bias (second-half only)
    out_ref  : (1, BAND, W, Cmid) bf16 result band (NHWC)
    out1_ref : VMEM scratch (BAND+2, W, Cmid) bf16 — out1 band + 1-row recomputed halo
    """
    Cin = x_ref.shape[-1]
    Cmid = out_ref.shape[-1]
    b = pl.program_id(1)
    n_bands = pl.num_programs(1)
    row0 = pl.multiple_of(b * BAND, BAND)   # first padded-input row this band needs

    # ---- conv1 (+ folded bias/BN + ReLU) on BAND+2 out1 rows (1-row halo recompute).
    # Padded-input rows row0 .. row0+BAND+3 cover image rows row0-2 .. row0+BAND+1,
    # exactly what conv1 needs for out1 image rows row0-1 .. row0+BAND.
    xin = x_ref[0, pl.ds(row0, BAND + 4), :, :]              # (BAND+4, W, Cin) bf16
    x_sh = [_shift_cols(xin, kx) for kx in range(3)]         # hoisted column taps
    acc1 = None
    for ky in range(3):
        for kx in range(3):
            tap = x_sh[kx][ky:ky + BAND + 2].reshape((BAND + 2) * W, Cin)
            d = jnp.dot(tap, w1_ref[ky * 3 + kx],
                        preferred_element_type=jnp.float32)
            acc1 = d if acc1 is None else acc1 + d
    out1 = jnp.maximum(acc1 * scale_ref[...] + shift_ref[...], 0.0)   # f32

    # ---- stage out1 (band + halo) in the bf16 scratch, interior at sublane offset 0.
    out1_ref[...] = out1.reshape(BAND + 2, W, Cmid).astype(jnp.bfloat16)

    # conv2 zero-pads rows at the image border: zero the halo row there.
    @pl.when(b == 0)
    def _():
        out1_ref[0:1, :, :] = jnp.zeros((1, W, Cmid), jnp.bfloat16)

    @pl.when(b == n_bands - 1)
    def _():
        out1_ref[BAND + 1:BAND + 2, :, :] = jnp.zeros((1, W, Cmid), jnp.bfloat16)

    # ---- conv2 (second half of its output channels): 9 accumulated K=Cmid tap dots.
    acc2 = None
    for ky in range(3):
        base = out1_ref[ky:ky + BAND, :, :]                  # (BAND, W, Cmid) bf16
        for kx in range(3):
            tap = _shift_cols(base, kx).reshape(BAND * W, Cmid)
            d = jnp.dot(tap, w2_ref[ky * 3 + kx],
                        preferred_element_type=jnp.float32)
            acc2 = d if acc2 is None else acc2 + d
    wv = acc2 + b2_ref[...]                                  # (BAND*W, Cmid) f32

    # ---- gated residual: relu(w * out1 + b) with b == w (re-read out1 from scratch).
    out1_mid = out1_ref[1:BAND + 1, :, :].reshape(BAND * W, Cmid)
    out_ref[0] = (jnp.maximum(wv * out1_mid + wv, 0.0)
                  .reshape(BAND, W, Cmid).astype(out_ref.dtype))


def sa_forward(x_nchw, params, *, band_rows=8):
    """Runs the SA forward pass. x_nchw: (N, Cin, H, W) float32. Returns (N, Cmid, H, W)."""
    w1, b1, gamma, beta, mean, var, w2, b2 = params
    eps = 1e-5
    Cmid = w1.shape[-1]
    N, Cin, H, W = x_nchw.shape

    # Row-band height: largest value <= band_rows that divides H.
    # TODO(synk): remainder-band handling (masked last band) for H not divisible by BAND.
    BAND = min(band_rows, H)
    while H % BAND != 0:
        BAND -= 1
    n_bands = H // BAND

    # NHWC, 2 zero rows of padding top/bottom (covers conv1's input halo for the
    # band's own 1-row out1 halo).  Column padding is handled in-kernel by shifted
    # zero-filled tap views, so the W (sublane) axis stays aligned at offset 0.
    x_nhwc = jnp.transpose(x_nchw, (0, 2, 3, 1))
    x_pad = jnp.pad(x_nhwc, ((0, 0), (2, 2), (0, 0), (0, 0))).astype(jnp.bfloat16)

    w1_t = w1.reshape(9, Cin, Cmid).astype(jnp.bfloat16)      # tap-major (ky*3+kx)
    scale = (gamma / jnp.sqrt(var + eps)).reshape(1, Cmid).astype(jnp.float32)
    shift = ((b1 - mean) * scale[0] + beta).reshape(1, Cmid).astype(jnp.float32)
    # Only the second half of conv2's output channels is ever used (w == b).
    w2_t = w2[..., Cmid:].reshape(9, Cmid, Cmid).astype(jnp.bfloat16)
    b2_half = b2[Cmid:].reshape(1, Cmid).astype(jnp.float32)

    # Generation-aware VMEM budget: leave headroom (esp. on v7x's 64 MiB/TC).
    try:
        vmem_cap = int(pltpu.get_tpu_info().vmem_capacity_bytes)
    except Exception:
        vmem_cap = 64 * 1024 * 1024
    vmem_limit = max(32 * 1024 * 1024,
                     min(vmem_cap * 3 // 4, 110 * 1024 * 1024))

    kernel = functools.partial(_sa_kernel, W=W, BAND=BAND)

    out_nhwc = pl.pallas_call(
        kernel,
        out_shape=jax.ShapeDtypeStruct((N, H, W, Cmid), jnp.bfloat16),
        grid_spec=pltpu.PrefetchScalarGridSpec(
            num_scalar_prefetch=0,
            grid=(N, n_bands),
            in_specs=[
                # Whole padded image per batch element; the block index is constant
                # across the band axis so it is DMA'd once per image and band rows
                # are sliced in-kernel (bands need overlapping input rows).
                pl.BlockSpec((1, H + 4, W, Cin), lambda n, b: (n, 0, 0, 0)),
                pl.BlockSpec((9, Cin, Cmid), lambda n, b: (0, 0, 0)),
                pl.BlockSpec((1, Cmid), lambda n, b: (0, 0)),
                pl.BlockSpec((1, Cmid), lambda n, b: (0, 0)),
                pl.BlockSpec((9, Cmid, Cmid), lambda n, b: (0, 0, 0)),
                pl.BlockSpec((1, Cmid), lambda n, b: (0, 0)),
            ],
            out_specs=pl.BlockSpec((1, BAND, W, Cmid), lambda n, b: (n, b, 0, 0)),
            scratch_shapes=[pltpu.VMEM((BAND + 2, W, Cmid), jnp.bfloat16)],
        ),
        compiler_params=pltpu.CompilerParams(
            dimension_semantics=("parallel", "parallel"),  # batches & bands independent
            vmem_limit_bytes=vmem_limit,
        ),
    )(x_pad, w1_t, scale, shift, w2_t, b2_half)

    return jnp.transpose(out_nhwc.astype(jnp.float32), (0, 3, 1, 2))


def sa_reference(x_nchw, params):
    """Pure-JAX f32 reference mirroring the PyTorch forward exactly (BN in eval mode)."""
    w1, b1, gamma, beta, mean, var, w2, b2 = params
    eps = 1e-5
    Cmid = w1.shape[-1]
    dn = ("NCHW", "HWIO", "NCHW")

    y = lax.conv_general_dilated(x_nchw, w1, (1, 1), "SAME", dimension_numbers=dn)
    y = y + b1[None, :, None, None]
    y = (y - mean[None, :, None, None]) / jnp.sqrt(var[None, :, None, None] + eps)
    y = y * gamma[None, :, None, None] + beta[None, :, None, None]
    out1 = jnp.maximum(y, 0.0)

    out2 = lax.conv_general_dilated(out1, w2, (1, 1), "SAME", dimension_numbers=dn)
    out2 = out2 + b2[None, :, None, None]

    w = out2[:, Cmid:, :, :]
    b = out2[:, Cmid:, :, :]
    return jnp.maximum(w * out1 + b, 0.0)


def make_params(key, in_channel, out):
    """Deterministic synthetic parameters matching the module's shapes (HWIO weights)."""
    ks = jax.random.split(key, 8)
    w1 = jax.random.normal(ks[0], (3, 3, in_channel, out), jnp.float32) * 0.1
    b1 = jax.random.normal(ks[1], (out,), jnp.float32) * 0.1
    gamma = 1.0 + 0.1 * jax.random.normal(ks[2], (out,), jnp.float32)
    beta = 0.1 * jax.random.normal(ks[3], (out,), jnp.float32)
    mean = 0.1 * jax.random.normal(ks[4], (out,), jnp.float32)
    var = 0.5 + jnp.abs(jax.random.normal(ks[5], (out,), jnp.float32)) * 0.5
    w2 = jax.random.normal(ks[6], (3, 3, out, 2 * out), jnp.float32) * 0.05
    b2 = jax.random.normal(ks[7], (2 * out,), jnp.float32) * 0.1
    return (w1, b1, gamma, beta, mean, var, w2, b2)


if __name__ == "__main__":
    key = jax.random.PRNGKey(0)
    k_x, k_p = jax.random.split(key)

    N, Cin, H, W = 2, 4, 16, 16
    OUT = 32  # self.out (default 256 in the module; small here)

    x = jax.random.normal(k_x, (N, Cin, H, W), jnp.float32)
    params = make_params(k_p, Cin, OUT)

    y_kernel = jax.block_until_ready(sa_forward(x, params))
    y_ref = jax.block_until_ready(sa_reference(x, params))

    assert y_kernel.shape == (N, OUT, H, W), y_kernel.shape
    # bf16 matmul operands / bf16 staging vs. the pure-f32 reference.
    assert jnp.allclose(y_kernel, y_ref, atol=2e-2, rtol=2e-2), (
        float(jnp.max(jnp.abs(y_kernel - y_ref))))

    print("KERNEL_OK")
</pallas_src>

<mosaic_0001>
module attributes {stable_mosaic.version = 11 : i64} {
  func.func @_sa_kernel(%arg0: i32, %arg1: i32, %arg2: memref<1x20x16x4xbf16, #tpu.memory_space<vmem>>, %arg3: memref<9x4x32xbf16, #tpu.memory_space<vmem>>, %arg4: memref<1x32xf32, #tpu.memory_space<vmem>>, %arg5: memref<1x32xf32, #tpu.memory_space<vmem>>, %arg6: memref<9x32x32xbf16, #tpu.memory_space<vmem>>, %arg7: memref<1x32xf32, #tpu.memory_space<vmem>>, %arg8: memref<1x8x16x32xbf16, #tpu.memory_space<vmem>>, %arg9: memref<10x16x32xbf16, #tpu.memory_space<vmem>>) attributes {dimension_semantics = [#tpu.dimension_semantics<parallel>, #tpu.dimension_semantics<parallel>], iteration_bounds = array<i64: 2, 2>, scalar_prefetch = 0 : i64, scratch_operands = 1 : i64, tpu.core_type = #tpu.core_type<tc>, window_params = [{transform_indices = @transform_0, window_bounds = array<i64: 1, 20, 16, 4>}, {pipeline_mode = #tpu.pipeline_mode<synchronous>, transform_indices = @transform_1, window_bounds = array<i64: 9, 4, 32>}, {pipeline_mode = #tpu.pipeline_mode<synchronous>, transform_indices = @transform_2, window_bounds = array<i64: 1, 32>}, {pipeline_mode = #tpu.pipeline_mode<synchronous>, transform_indices = @transform_3, window_bounds = array<i64: 1, 32>}, {pipeline_mode = #tpu.pipeline_mode<synchronous>, transform_indices = @transform_4, window_bounds = array<i64: 9, 32, 32>}, {pipeline_mode = #tpu.pipeline_mode<synchronous>, transform_indices = @transform_5, window_bounds = array<i64: 1, 32>}, {transform_indices = @transform_6, window_bounds = array<i64: 1, 8, 16, 32>}]} {
    %c8_i32 = arith.constant 8 : i32
    %0 = arith.muli %arg1, %c8_i32 : i32
    %1 = tpu.assume_multiple %0, 8 : i32
    %c0 = arith.constant 0 : index
    %2 = arith.index_cast %1 : i32 to index
    %c0_0 = arith.constant 0 : index
    %c0_1 = arith.constant 0 : index
    %3 = vector.load %arg2[%c0, %2, %c0_0, %c0_1] : memref<1x20x16x4xbf16, #tpu.memory_space<vmem>>, vector<1x12x16x4xbf16>
    %4 = vector.shape_cast %3 : vector<1x12x16x4xbf16> to vector<12x16x4xbf16>
    %cst = arith.constant 0.000000e+00 : bf16
    %5 = vector.broadcast %cst : bf16 to vector<12x1x4xbf16>
    %6 = vector.extract_strided_slice %4 {offsets = [0, 0, 0], sizes = [12, 15, 4], strides = [1, 1, 1]} : vector<12x16x4xbf16> to vector<12x15x4xbf16>
    %7 = tpu.concatenate %5, %6 in 1 : vector<12x1x4xbf16>, vector<12x15x4xbf16> -> vector<12x16x4xbf16>
    %cst_2 = arith.constant 0.000000e+00 : bf16
    %8 = vector.broadcast %cst_2 : bf16 to vector<12x1x4xbf16>
    %9 = vector.extract_strided_slice %4 {offsets = [0, 1, 0], sizes = [12, 15, 4], strides = [1, 1, 1]} : vector<12x16x4xbf16> to vector<12x15x4xbf16>
    %10 = tpu.concatenate %9, %8 in 1 : vector<12x15x4xbf16>, vector<12x1x4xbf16> -> vector<12x16x4xbf16>
    %11 = vector.extract_strided_slice %7 {offsets = [0, 0, 0], sizes = [10, 16, 4], strides = [1, 1, 1]} : vector<12x16x4xbf16> to vector<10x16x4xbf16>
    %12 = vector.shape_cast %11 : vector<10x16x4xbf16> to vector<160x4xbf16>
    %c0_3 = arith.constant 0 : index
    %c0_4 = arith.constant 0 : index
    %c0_5 = arith.constant 0 : index
    %13 = vector.load %arg3[%c0_3, %c0_4, %c0_5] : memref<9x4x32xbf16, #tpu.memory_space<vmem>>, vector<1x4x32xbf16>
    %14 = vector.shape_cast %13 : vector<1x4x32xbf16> to vector<4x32xbf16>
    %cst_6 = arith.constant dense<0.000000e+00> : vector<160x32xf32>
    %15 = tpu.matmul %12, %14, %cst_6 {dimension_numbers = #tpu.dot_dimension_numbers<[1], [0], [0], [1], [0, 0, 1, 1], [], []>} : vector<160x4xbf16>, vector<4x32xbf16>, vector<160x32xf32> -> vector<160x32xf32>
    %16 = vector.extract_strided_slice %4 {offsets = [0, 0, 0], sizes = [10, 16, 4], strides = [1, 1, 1]} : vector<12x16x4xbf16> to vector<10x16x4xbf16>
    %17 = vector.shape_cast %16 : vector<10x16x4xbf16> to vector<160x4xbf16>
    %c1 = arith.constant 1 : index
    %c0_7 = arith.constant 0 : index
    %c0_8 = arith.constant 0 : index
    %18 = vector.load %arg3[%c1, %c0_7, %c0_8] : memref<9x4x32xbf16, #tpu.memory_space<vmem>>, vector<1x4x32xbf16>
    %19 = vector.shape_cast %18 : vector<1x4x32xbf16> to vector<4x32xbf16>
    %cst_9 = arith.constant dense<0.000000e+00> : vector<160x32xf32>
    %20 = tpu.matmul %17, %19, %cst_9 {dimension_numbers = #tpu.dot_dimension_numbers<[1], [0], [0], [1], [0, 0, 1, 1], [], []>} : vector<160x4xbf16>, vector<4x32xbf16>, vector<160x32xf32> -> vector<160x32xf32>
    %21 = arith.addf %15, %20 : vector<160x32xf32>
    %22 = vector.extract_strided_slice %10 {offsets = [0, 0, 0], sizes = [10, 16, 4], strides = [1, 1, 1]} : vector<12x16x4xbf16> to vector<10x16x4xbf16>
    %23 = vector.shape_cast %22 : vector<10x16x4xbf16> to vector<160x4xbf16>
    %c2 = arith.constant 2 : index
    %c0_10 = arith.constant 0 : index
    %c0_11 = arith.constant 0 : index
    %24 = vector.load %arg3[%c2, %c0_10, %c0_11] : memref<9x4x32xbf16, #tpu.memory_space<vmem>>, vector<1x4x32xbf16>
    %25 = vector.shape_cast %24 : vector<1x4x32xbf16> to vector<4x32xbf16>
    %cst_12 = arith.constant dense<0.000000e+00> : vector<160x32xf32>
    %26 = tpu.matmul %23, %25, %cst_12 {dimension_numbers = #tpu.dot_dimension_numbers<[1], [0], [0], [1], [0, 0, 1, 1], [], []>} : vector<160x4xbf16>, vector<4x32xbf16>, vector<160x32xf32> -> vector<160x32xf32>
    %27 = arith.addf %21, %26 : vector<160x32xf32>
    %28 = vector.extract_strided_slice %7 {offsets = [1, 0, 0], sizes = [10, 16, 4], strides = [1, 1, 1]} : vector<12x16x4xbf16> to vector<10x16x4xbf16>
    %29 = vector.shape_cast %28 : vector<10x16x4xbf16> to vector<160x4xbf16>
    %c3 = arith.constant 3 : index
    %c0_13 = arith.constant 0 : index
    %c0_14 = arith.constant 0 : index
    %30 = vector.load %arg3[%c3, %c0_13, %c0_14] : memref<9x4x32xbf16, #tpu.memory_space<vmem>>, vector<1x4x32xbf16>
    %31 = vector.shape_cast %30 : vector<1x4x32xbf16> to vector<4x32xbf16>
    %cst_15 = arith.constant dense<0.000000e+00> : vector<160x32xf32>
    %32 = tpu.matmul %29, %31, %cst_15 {dimension_numbers = #tpu.dot_dimension_numbers<[1], [0], [0], [1], [0, 0, 1, 1], [], []>} : vector<160x4xbf16>, vector<4x32xbf16>, vector<160x32xf32> -> vector<160x32xf32>
    %33 = arith.addf %27, %32 : vector<160x32xf32>
    %34 = vector.extract_strided_slice %4 {offsets = [1, 0, 0], sizes = [10, 16, 4], strides = [1, 1, 1]} : vector<12x16x4xbf16> to vector<10x16x4xbf16>
    %35 = vector.shape_cast %34 : vector<10x16x4xbf16> to vector<160x4xbf16>
    %c4 = arith.constant 4 : index
    %c0_16 = arith.constant 0 : index
    %c0_17 = arith.constant 0 : index
    %36 = vector.load %arg3[%c4, %c0_16, %c0_17] : memref<9x4x32xbf16, #tpu.memory_space<vmem>>, vector<1x4x32xbf16>
    %37 = vector.shape_cast %36 : vector<1x4x32xbf16> to vector<4x32xbf16>
    %cst_18 = arith.constant dense<0.000000e+00> : vector<160x32xf32>
    %38 = tpu.matmul %35, %37, %cst_18 {dimension_numbers = #tpu.dot_dimension_numbers<[1], [0], [0], [1], [0, 0, 1, 1], [], []>} : vector<160x4xbf16>, vector<4x32xbf16>, vector<160x32xf32> -> vector<160x32xf32>
    %39 = arith.addf %33, %38 : vector<160x32xf32>
    %40 = vector.extract_strided_slice %10 {offsets = [1, 0, 0], sizes = [10, 16, 4], strides = [1, 1, 1]} : vector<12x16x4xbf16> to vector<10x16x4xbf16>
    %41 = vector.shape_cast %40 : vector<10x16x4xbf16> to vector<160x4xbf16>
    %c5 = arith.constant 5 : index
    %c0_19 = arith.constant 0 : index
    %c0_20 = arith.constant 0 : index
    %42 = vector.load %arg3[%c5, %c0_19, %c0_20] : memref<9x4x32xbf16, #tpu.memory_space<vmem>>, vector<1x4x32xbf16>
    %43 = vector.shape_cast %42 : vector<1x4x32xbf16> to vector<4x32xbf16>
    %cst_21 = arith.constant dense<0.000000e+00> : vector<160x32xf32>
    %44 = tpu.matmul %41, %43, %cst_21 {dimension_numbers = #tpu.dot_dimension_numbers<[1], [0], [0], [1], [0, 0, 1, 1], [], []>} : vector<160x4xbf16>, vector<4x32xbf16>, vector<160x32xf32> -> vector<160x32xf32>
    %45 = arith.addf %39, %44 : vector<160x32xf32>
    %46 = vector.extract_strided_slice %7 {offsets = [2, 0, 0], sizes = [10, 16, 4], strides = [1, 1, 1]} : vector<12x16x4xbf16> to vector<10x16x4xbf16>
    %47 = vector.shape_cast %46 : vector<10x16x4xbf16> to vector<160x4xbf16>
    %c6 = arith.constant 6 : index
    %c0_22 = arith.constant 0 : index
    %c0_23 = arith.constant 0 : index
    %48 = vector.load %arg3[%c6, %c0_22, %c0_23] : memref<9x4x32xbf16, #tpu.memory_space<vmem>>, vector<1x4x32xbf16>
    %49 = vector.shape_cast %48 : vector<1x4x32xbf16> to vector<4x32xbf16>
    %cst_24 = arith.constant dense<0.000000e+00> : vector<160x32xf32>
    %50 = tpu.matmul %47, %49, %cst_24 {dimension_numbers = #tpu.dot_dimension_numbers<[1], [0], [0], [1], [0, 0, 1, 1], [], []>} : vector<160x4xbf16>, vector<4x32xbf16>, vector<160x32xf32> -> vector<160x32xf32>
    %51 = arith.addf %45, %50 : vector<160x32xf32>
    %52 = vector.extract_strided_slice %4 {offsets = [2, 0, 0], sizes = [10, 16, 4], strides = [1, 1, 1]} : vector<12x16x4xbf16> to vector<10x16x4xbf16>
    %53 = vector.shape_cast %52 : vector<10x16x4xbf16> to vector<160x4xbf16>
    %c7 = arith.constant 7 : index
    %c0_25 = arith.constant 0 : index
    %c0_26 = arith.constant 0 : index
    %54 = vector.load %arg3[%c7, %c0_25, %c0_26] : memref<9x4x32xbf16, #tpu.memory_space<vmem>>, vector<1x4x32xbf16>
    %55 = vector.shape_cast %54 : vector<1x4x32xbf16> to vector<4x32xbf16>
    %cst_27 = arith.constant dense<0.000000e+00> : vector<160x32xf32>
    %56 = tpu.matmul %53, %55, %cst_27 {dimension_numbers = #tpu.dot_dimension_numbers<[1], [0], [0], [1], [0, 0, 1, 1], [], []>} : vector<160x4xbf16>, vector<4x32xbf16>, vector<160x32xf32> -> vector<160x32xf32>
    %57 = arith.addf %51, %56 : vector<160x32xf32>
    %58 = vector.extract_strided_slice %10 {offsets = [2, 0, 0], sizes = [10, 16, 4], strides = [1, 1, 1]} : vector<12x16x4xbf16> to vector<10x16x4xbf16>
    %59 = vector.shape_cast %58 : vector<10x16x4xbf16> to vector<160x4xbf16>
    %c8 = arith.constant 8 : index
    %c0_28 = arith.constant 0 : index
    %c0_29 = arith.constant 0 : index
    %60 = vector.load %arg3[%c8, %c0_28, %c0_29] : memref<9x4x32xbf16, #tpu.memory_space<vmem>>, vector<1x4x32xbf16>
    %61 = vector.shape_cast %60 : vector<1x4x32xbf16> to vector<4x32xbf16>
    %cst_30 = arith.constant dense<0.000000e+00> : vector<160x32xf32>
    %62 = tpu.matmul %59, %61, %cst_30 {dimension_numbers = #tpu.dot_dimension_numbers<[1], [0], [0], [1], [0, 0, 1, 1], [], []>} : vector<160x4xbf16>, vector<4x32xbf16>, vector<160x32xf32> -> vector<160x32xf32>
    %63 = arith.addf %57, %62 : vector<160x32xf32>
    %c0_31 = arith.constant 0 : index
    %c0_32 = arith.constant 0 : index
    %64 = vector.load %arg4[%c0_31, %c0_32] : memref<1x32xf32, #tpu.memory_space<vmem>>, vector<1x32xf32>
    %65 = vector.broadcast %64 : vector<1x32xf32> to vector<160x32xf32>
    %66 = arith.mulf %63, %65 : vector<160x32xf32>
    %c0_33 = arith.constant 0 : index
    %c0_34 = arith.constant 0 : index
    %67 = vector.load %arg5[%c0_33, %c0_34] : memref<1x32xf32, #tpu.memory_space<vmem>>, vector<1x32xf32>
    %68 = vector.broadcast %67 : vector<1x32xf32> to vector<160x32xf32>
    %69 = arith.addf %66, %68 : vector<160x32xf32>
    %cst_35 = arith.constant 0.000000e+00 : f32
    %70 = vector.broadcast %cst_35 : f32 to vector<160x32xf32>
    %71 = arith.maximumf %69, %70 : vector<160x32xf32>
    %72 = vector.shape_cast %71 : vector<160x32xf32> to vector<10x16x32xf32>
    %73 = arith.truncf %72 : vector<10x16x32xf32> to vector<10x16x32xbf16>
    %c0_36 = arith.constant 0 : index
    %c0_37 = arith.constant 0 : index
    %c0_38 = arith.constant 0 : index
    %74 = vector.load %arg9[%c0_36, %c0_37, %c0_38] : memref<10x16x32xbf16, #tpu.memory_space<vmem>>, vector<10x16x32xbf16>
    tpu.vector_store %arg9[%c0_36, %c0_37, %c0_38], %73 {strides = array<i32>} : memref<10x16x32xbf16, #tpu.memory_space<vmem>>, vector<10x16x32xbf16>,
    %c0_i32 = arith.constant 0 : i32
    %75 = arith.cmpi eq, %arg1, %c0_i32 : i32
    %76 = arith.extui %75 : i1 to i32
    %c0_i32_39 = arith.constant 0 : i32
    %77 = arith.cmpi ne, %76, %c0_i32_39 : i32
    scf.if %77 {
      %cst_102 = arith.constant 0.000000e+00 : bf16
      %161 = vector.broadcast %cst_102 : bf16 to vector<1x16x32xbf16>
      %c0_103 = arith.constant 0 : index
      %c0_104 = arith.constant 0 : index
      %c0_105 = arith.constant 0 : index
      %162 = vector.load %arg9[%c0_103, %c0_104, %c0_105] : memref<10x16x32xbf16, #tpu.memory_space<vmem>>, vector<1x16x32xbf16>
      tpu.vector_store %arg9[%c0_103, %c0_104, %c0_105], %161 {strides = array<i32>} : memref<10x16x32xbf16, #tpu.memory_space<vmem>>, vector<1x16x32xbf16>,
    } else {
    }
    %c1_i32 = arith.constant 1 : i32
    %78 = arith.cmpi eq, %arg1, %c1_i32 : i32
    %79 = arith.extui %78 : i1 to i32
    %c0_i32_40 = arith.constant 0 : i32
    %80 = arith.cmpi ne, %79, %c0_i32_40 : i32
    scf.if %80 {
      %cst_102 = arith.constant 0.000000e+00 : bf16
      %161 = vector.broadcast %cst_102 : bf16 to vector<1x16x32xbf16>
      %c9 = arith.constant 9 : index
      %c0_103 = arith.constant 0 : index
      %c0_104 = arith.constant 0 : index
      %162 = vector.load %arg9[%c9, %c0_103, %c0_104] : memref<10x16x32xbf16, #tpu.memory_space<vmem>>, vector<1x16x32xbf16>
      tpu.vector_store %arg9[%c9, %c0_103, %c0_104], %161 {strides = array<i32>} : memref<10x16x32xbf16, #tpu.memory_space<vmem>>, vector<1x16x32xbf16>,
    } else {
    }
    %c0_41 = arith.constant 0 : index
    %c0_42 = arith.constant 0 : index
    %c0_43 = arith.constant 0 : index
    %81 = vector.load %arg9[%c0_41, %c0_42, %c0_43] : memref<10x16x32xbf16, #tpu.memory_space<vmem>>, vector<8x16x32xbf16>
    %cst_44 = arith.constant 0.000000e+00 : bf16
    %82 = vector.broadcast %cst_44 : bf16 to vector<8x1x32xbf16>
    %83 = vector.extract_strided_slice %81 {offsets = [0, 0, 0], sizes = [8, 15, 32], strides = [1, 1, 1]} : vector<8x16x32xbf16> to vector<8x15x32xbf16>
    %84 = tpu.concatenate %82, %83 in 1 : vector<8x1x32xbf16>, vector<8x15x32xbf16> -> vector<8x16x32xbf16>
    %85 = vector.shape_cast %84 : vector<8x16x32xbf16> to vector<128x32xbf16>
    %c0_45 = arith.constant 0 : index
    %c0_46 = arith.constant 0 : index
    %c0_47 = arith.constant 0 : index
    %86 = vector.load %arg6[%c0_45, %c0_46, %c0_47] : memref<9x32x32xbf16, #tpu.memory_space<vmem>>, vector<1x32x32xbf16>
    %87 = vector.shape_cast %86 : vector<1x32x32xbf16> to vector<32x32xbf16>
    %cst_48 = arith.constant dense<0.000000e+00> : vector<128x32xf32>
    %88 = tpu.matmul %85, %87, %cst_48 {dimension_numbers = #tpu.dot_dimension_numbers<[1], [0], [0], [1], [0, 0, 1, 1], [], []>} : vector<128x32xbf16>, vector<32x32xbf16>, vector<128x32xf32> -> vector<128x32xf32>
    %89 = vector.shape_cast %81 : vector<8x16x32xbf16> to vector<128x32xbf16>
    %c1_49 = arith.constant 1 : index
    %c0_50 = arith.constant 0 : index
    %c0_51 = arith.constant 0 : index
    %90 = vector.load %arg6[%c1_49, %c0_50, %c0_51] : memref<9x32x32xbf16, #tpu.memory_space<vmem>>, vector<1x32x32xbf16>
    %91 = vector.shape_cast %90 : vector<1x32x32xbf16> to vector<32x32xbf16>
    %cst_52 = arith.constant dense<0.000000e+00> : vector<128x32xf32>
    %92 = tpu.matmul %89, %91, %cst_52 {dimension_numbers = #tpu.dot_dimension_numbers<[1], [0], [0], [1], [0, 0, 1, 1], [], []>} : vector<128x32xbf16>, vector<32x32xbf16>, vector<128x32xf32> -> vector<128x32xf32>
    %93 = arith.addf %88, %92 : vector<128x32xf32>
    %cst_53 = arith.constant 0.000000e+00 : bf16
    %94 = vector.broadcast %cst_53 : bf16 to vector<8x1x32xbf16>
    %95 = vector.extract_strided_slice %81 {offsets = [0, 1, 0], sizes = [8, 15, 32], strides = [1, 1, 1]} : vector<8x16x32xbf16> to vector<8x15x32xbf16>
    %96 = tpu.concatenate %95, %94 in 1 : vector<8x15x32xbf16>, vector<8x1x32xbf16> -> vector<8x16x32xbf16>
    %97 = vector.shape_cast %96 : vector<8x16x32xbf16> to vector<128x32xbf16>
    %c2_54 = arith.constant 2 : index
    %c0_55 = arith.constant 0 : index
    %c0_56 = arith.constant 0 : index
    %98 = vector.load %arg6[%c2_54, %c0_55, %c0_56] : memref<9x32x32xbf16, #tpu.memory_space<vmem>>, vector<1x32x32xbf16>
    %99 = vector.shape_cast %98 : vector<1x32x32xbf16> to vector<32x32xbf16>
    %cst_57 = arith.constant dense<0.000000e+00> : vector<128x32xf32>
    %100 = tpu.matmul %97, %99, %cst_57 {dimension_numbers = #tpu.dot_dimension_numbers<[1], [0], [0], [1], [0, 0, 1, 1], [], []>} : vector<128x32xbf16>, vector<32x32xbf16>, vector<128x32xf32> -> vector<128x32xf32>
    %101 = arith.addf %93, %100 : vector<128x32xf32>
    %c1_58 = arith.constant 1 : index
    %c0_59 = arith.constant 0 : index
    %c0_60 = arith.constant 0 : index
    %102 = vector.load %arg9[%c1_58, %c0_59, %c0_60] : memref<10x16x32xbf16, #tpu.memory_space<vmem>>, vector<8x16x32xbf16>
    %cst_61 = arith.constant 0.000000e+00 : bf16
    %103 = vector.broadcast %cst_61 : bf16 to vector<8x1x32xbf16>
    %104 = vector.extract_strided_slice %102 {offsets = [0, 0, 0], sizes = [8, 15, 32], strides = [1, 1, 1]} : vector<8x16x32xbf16> to vector<8x15x32xbf16>
    %105 = tpu.concatenate %103, %104 in 1 : vector<8x1x32xbf16>, vector<8x15x32xbf16> -> vector<8x16x32xbf16>
    %106 = vector.shape_cast %105 : vector<8x16x32xbf16> to vector<128x32xbf16>
    %c3_62 = arith.constant 3 : index
    %c0_63 = arith.constant 0 : index
    %c0_64 = arith.constant 0 : index
    %107 = vector.load %arg6[%c3_62, %c0_63, %c0_64] : memref<9x32x32xbf16, #tpu.memory_space<vmem>>, vector<1x32x32xbf16>
    %108 = vector.shape_cast %107 : vector<1x32x32xbf16> to vector<32x32xbf16>
    %cst_65 = arith.constant dense<0.000000e+00> : vector<128x32xf32>
    %109 = tpu.matmul %106, %108, %cst_65 {dimension_numbers = #tpu.dot_dimension_numbers<[1], [0], [0], [1], [0, 0, 1, 1], [], []>} : vector<128x32xbf16>, vector<32x32xbf16>, vector<128x32xf32> -> vector<128x32xf32>
    %110 = arith.addf %101, %109 : vector<128x32xf32>
    %111 = vector.shape_cast %102 : vector<8x16x32xbf16> to vector<128x32xbf16>
    %c4_66 = arith.constant 4 : index
    %c0_67 = arith.constant 0 : index
    %c0_68 = arith.constant 0 : index
    %112 = vector.load %arg6[%c4_66, %c0_67, %c0_68] : memref<9x32x32xbf16, #tpu.memory_space<vmem>>, vector<1x32x32xbf16>
    %113 = vector.shape_cast %112 : vector<1x32x32xbf16> to vector<32x32xbf16>
    %cst_69 = arith.constant dense<0.000000e+00> : vector<128x32xf32>
    %114 = tpu.matmul %111, %113, %cst_69 {dimension_numbers = #tpu.dot_dimension_numbers<[1], [0], [0], [1], [0, 0, 1, 1], [], []>} : vector<128x32xbf16>, vector<32x32xbf16>, vector<128x32xf32> -> vector<128x32xf32>
    %115 = arith.addf %110, %114 : vector<128x32xf32>
    %cst_70 = arith.constant 0.000000e+00 : bf16
    %116 = vector.broadcast %cst_70 : bf16 to vector<8x1x32xbf16>
    %117 = vector.extract_strided_slice %102 {offsets = [0, 1, 0], sizes = [8, 15, 32], strides = [1, 1, 1]} : vector<8x16x32xbf16> to vector<8x15x32xbf16>
    %118 = tpu.concatenate %117, %116 in 1 : vector<8x15x32xbf16>, vector<8x1x32xbf16> -> vector<8x16x32xbf16>
    %119 = vector.shape_cast %118 : vector<8x16x32xbf16> to vector<128x32xbf16>
    %c5_71 = arith.constant 5 : index
    %c0_72 = arith.constant 0 : index
    %c0_73 = arith.constant 0 : index
    %120 = vector.load %arg6[%c5_71, %c0_72, %c0_73] : memref<9x32x32xbf16, #tpu.memory_space<vmem>>, vector<1x32x32xbf16>
    %121 = vector.shape_cast %120 : vector<1x32x32xbf16> to vector<32x32xbf16>
    %cst_74 = arith.constant dense<0.000000e+00> : vector<128x32xf32>
    %122 = tpu.matmul %119, %121, %cst_74 {dimension_numbers = #tpu.dot_dimension_numbers<[1], [0], [0], [1], [0, 0, 1, 1], [], []>} : vector<128x32xbf16>, vector<32x32xbf16>, vector<128x32xf32> -> vector<128x32xf32>
    %123 = arith.addf %115, %122 : vector<128x32xf32>
    %c2_75 = arith.constant 2 : index
    %c0_76 = arith.constant 0 : index
    %c0_77 = arith.constant 0 : index
    %124 = vector.load %arg9[%c2_75, %c0_76, %c0_77] : memref<10x16x32xbf16, #tpu.memory_space<vmem>>, vector<8x16x32xbf16>
    %cst_78 = arith.constant 0.000000e+00 : bf16
    %125 = vector.broadcast %cst_78 : bf16 to vector<8x1x32xbf16>
    %126 = vector.extract_strided_slice %124 {offsets = [0, 0, 0], sizes = [8, 15, 32], strides = [1, 1, 1]} : vector<8x16x32xbf16> to vector<8x15x32xbf16>
    %127 = tpu.concatenate %125, %126 in 1 : vector<8x1x32xbf16>, vector<8x15x32xbf16> -> vector<8x16x32xbf16>
    %128 = vector.shape_cast %127 : vector<8x16x32xbf16> to vector<128x32xbf16>
    %c6_79 = arith.constant 6 : index
    %c0_80 = arith.constant 0 : index
    %c0_81 = arith.constant 0 : index
    %129 = vector.load %arg6[%c6_79, %c0_80, %c0_81] : memref<9x32x32xbf16, #tpu.memory_space<vmem>>, vector<1x32x32xbf16>
    %130 = vector.shape_cast %129 : vector<1x32x32xbf16> to vector<32x32xbf16>
    %cst_82 = arith.constant dense<0.000000e+00> : vector<128x32xf32>
    %131 = tpu.matmul %128, %130, %cst_82 {dimension_numbers = #tpu.dot_dimension_numbers<[1], [0], [0], [1], [0, 0, 1, 1], [], []>} : vector<128x32xbf16>, vector<32x32xbf16>, vector<128x32xf32> -> vector<128x32xf32>
    %132 = arith.addf %123, %131 : vector<128x32xf32>
    %133 = vector.shape_cast %124 : vector<8x16x32xbf16> to vector<128x32xbf16>
    %c7_83 = arith.constant 7 : index
    %c0_84 = arith.constant 0 : index
    %c0_85 = arith.constant 0 : index
    %134 = vector.load %arg6[%c7_83, %c0_84, %c0_85] : memref<9x32x32xbf16, #tpu.memory_space<vmem>>, vector<1x32x32xbf16>
    %135 = vector.shape_cast %134 : vector<1x32x32xbf16> to vector<32x32xbf16>
    %cst_86 = arith.constant dense<0.000000e+00> : vector<128x32xf32>
    %136 = tpu.matmul %133, %135, %cst_86 {dimension_numbers = #tpu.dot_dimension_numbers<[1], [0], [0], [1], [0, 0, 1, 1], [], []>} : vector<128x32xbf16>, vector<32x32xbf16>, vector<128x32xf32> -> vector<128x32xf32>
    %137 = arith.addf %132, %136 : vector<128x32xf32>
    %cst_87 = arith.constant 0.000000e+00 : bf16
    %138 = vector.broadcast %cst_87 : bf16 to vector<8x1x32xbf16>
    %139 = vector.extract_strided_slice %124 {offsets = [0, 1, 0], sizes = [8, 15, 32], strides = [1, 1, 1]} : vector<8x16x32xbf16> to vector<8x15x32xbf16>
    %140 = tpu.concatenate %139, %138 in 1 : vector<8x15x32xbf16>, vector<8x1x32xbf16> -> vector<8x16x32xbf16>
    %141 = vector.shape_cast %140 : vector<8x16x32xbf16> to vector<128x32xbf16>
    %c8_88 = arith.constant 8 : index
    %c0_89 = arith.constant 0 : index
    %c0_90 = arith.constant 0 : index
    %142 = vector.load %arg6[%c8_88, %c0_89, %c0_90] : memref<9x32x32xbf16, #tpu.memory_space<vmem>>, vector<1x32x32xbf16>
    %143 = vector.shape_cast %142 : vector<1x32x32xbf16> to vector<32x32xbf16>
    %cst_91 = arith.constant dense<0.000000e+00> : vector<128x32xf32>
    %144 = tpu.matmul %141, %143, %cst_91 {dimension_numbers = #tpu.dot_dimension_numbers<[1], [0], [0], [1], [0, 0, 1, 1], [], []>} : vector<128x32xbf16>, vector<32x32xbf16>, vector<128x32xf32> -> vector<128x32xf32>
    %145 = arith.addf %137, %144 : vector<128x32xf32>
    %c0_92 = arith.constant 0 : index
    %c0_93 = arith.constant 0 : index
    %146 = vector.load %arg7[%c0_92, %c0_93] : memref<1x32xf32, #tpu.memory_space<vmem>>, vector<1x32xf32>
    %147 = vector.broadcast %146 : vector<1x32xf32> to vector<128x32xf32>
    %148 = arith.addf %145, %147 : vector<128x32xf32>
    %c1_94 = arith.constant 1 : index
    %c0_95 = arith.constant 0 : index
    %c0_96 = arith.constant 0 : index
    %149 = vector.load %arg9[%c1_94, %c0_95, %c0_96] : memref<10x16x32xbf16, #tpu.memory_space<vmem>>, vector<8x16x32xbf16>
    %150 = vector.shape_cast %149 : vector<8x16x32xbf16> to vector<128x32xbf16>
    %151 = arith.extf %150 : vector<128x32xbf16> to vector<128x32xf32>
    %152 = arith.mulf %148, %151 : vector<128x32xf32>
    %153 = arith.addf %152, %148 : vector<128x32xf32>
    %cst_97 = arith.constant 0.000000e+00 : f32
    %154 = vector.broadcast %cst_97 : f32 to vector<128x32xf32>
    %155 = arith.maximumf %153, %154 : vector<128x32xf32>
    %156 = vector.shape_cast %155 : vector<128x32xf32> to vector<8x16x32xf32>
    %157 = arith.truncf %156 : vector<8x16x32xf32> to vector<8x16x32xbf16>
    %c0_98 = arith.constant 0 : index
    %c0_99 = arith.constant 0 : index
    %c0_100 = arith.constant 0 : index
    %c0_101 = arith.constant 0 : index
    %158 = vector.load %arg8[%c0_98, %c0_99, %c0_100, %c0_101] : memref<1x8x16x32xbf16, #tpu.memory_space<vmem>>, vector<1x8x16x32xbf16>
    %159 = vector.shape_cast %158 : vector<1x8x16x32xbf16> to vector<8x16x32xbf16>
    %160 = vector.shape_cast %157 : vector<8x16x32xbf16> to vector<1x8x16x32xbf16>
    tpu.vector_store %arg8[%c0_98, %c0_99, %c0_100, %c0_101], %160 {strides = array<i32>} : memref<1x8x16x32xbf16, #tpu.memory_space<vmem>>, vector<1x8x16x32xbf16>,
    return
  }
  func.func @transform_0(%arg0: i32, %arg1: i32) -> (i32, i32, i32, i32) {
    %c0_i32 = arith.constant 0 : i32
    %c0_i32_0 = arith.constant 0 : i32
    %c0_i32_1 = arith.constant 0 : i32
    %c0_i32_2 = arith.constant 0 : i32
    return %arg0, %c0_i32, %c0_i32_0, %c0_i32_1 : i32, i32, i32, i32
  }
  func.func @transform_1(%arg0: i32, %arg1: i32) -> (i32, i32, i32) {
    %c0_i32 = arith.constant 0 : i32
    %c0_i32_0 = arith.constant 0 : i32
    %c0_i32_1 = arith.constant 0 : i32
    %c0_i32_2 = arith.constant 0 : i32
    return %c0_i32, %c0_i32_0, %c0_i32_1 : i32, i32, i32
  }
  func.func @transform_2(%arg0: i32, %arg1: i32) -> (i32, i32) {
    %c0_i32 = arith.constant 0 : i32
    %c0_i32_0 = arith.constant 0 : i32
    %c0_i32_1 = arith.constant 0 : i32
    return %c0_i32, %c0_i32_0 : i32, i32
  }
  func.func @transform_3(%arg0: i32, %arg1: i32) -> (i32, i32) {
    %c0_i32 = arith.constant 0 : i32
    %c0_i32_0 = arith.constant 0 : i32
    %c0_i32_1 = arith.constant 0 : i32
    return %c0_i32, %c0_i32_0 : i32, i32
  }
  func.func @transform_4(%arg0: i32, %arg1: i32) -> (i32, i32, i32) {
    %c0_i32 = arith.constant 0 : i32
    %c0_i32_0 = arith.constant 0 : i32
    %c0_i32_1 = arith.constant 0 : i32
    %c0_i32_2 = arith.constant 0 : i32
    return %c0_i32, %c0_i32_0, %c0_i32_1 : i32, i32, i32
  }
  func.func @transform_5(%arg0: i32, %arg1: i32) -> (i32, i32) {
    %c0_i32 = arith.constant 0 : i32
    %c0_i32_0 = arith.constant 0 : i32
    %c0_i32_1 = arith.constant 0 : i32
    return %c0_i32, %c0_i32_0 : i32, i32
  }
  func.func @transform_6(%arg0: i32, %arg1: i32) -> (i32, i32, i32, i32) {
    %c0_i32 = arith.constant 0 : i32
    %c0_i32_0 = arith.constant 0 : i32
    %c0_i32_1 = arith.constant 0 : i32
    return %arg0, %arg1, %c0_i32, %c0_i32_0 : i32, i32, i32, i32
  }
}

</mosaic_0001>

<llo_original>
// kernel: tpu_custom_call.1
$region0: #{tpu_custom_call.1}
  #allocation0 [shape = 'u32[]', space=smem, size = 0x4, offset = 0x4, fixed_abs, tag = 'smem constant byte address 0x4 - core index']
  #allocation1 [shape = 'u32[72,128]{1,0:T(1,128)}', space=vmem, size = 0x9000, scoped, tag = 'internal scratch']
  #allocation2 [shape = 'bf16[10,16,32]{2,1,0:T(8,128)(2,1)}', space=vmem, size = 0xa000, scoped, tag = 'scratch operand']
  %s0 = inlined_call_operand.vmem [shape: bf16[2,20,16,4], index: 0, kind: input, shape index: {}]
  %s1 = inlined_call_operand.vmem [shape: bf16[9,4,32], index: 1, kind: input, shape index: {}]
  %s2 = inlined_call_operand.vmem [shape: f32[1,32], index: 2, kind: input, shape index: {}]
  %s3 = inlined_call_operand.vmem [shape: f32[1,32], index: 3, kind: input, shape index: {}]
  %s4 = inlined_call_operand.vmem [shape: bf16[9,32,32], index: 4, kind: input, shape index: {}]
  %s5 = inlined_call_operand.vmem [shape: f32[1,32], index: 5, kind: input, shape index: {}]
  %s6 = inlined_call_operand.hbm [shape: bf16[2,16,16,32], index: 6, kind: output, shape index: {}]
  %s7 = sld [smem:[#allocation0]]
  $region65: #{tpu_custom_call.1} parent=0
    _
  %s9 = ssub.s32 1, %s7
  %s10 = scalar_select 0, %s9, %s7
  $region1: #{tpu_custom_call.1} parent=0
    #allocation3 [shape = 'u8[65536]{0}', space=vmem, size = 0x10000, scoped, tag = 'output window, operand 0']
    #allocation4 [shape = 's32[2]{0}', space=sflag, size = 0x8, scoped, tag = 'scoped memory for tpu_custom_call.1']
    %11 = vsyncpa [#allocation4], 0
    %s12 = scalar_lea.sflag [#allocation4], 1
    %13 = vsyncpa %s12, 0
    loop: start=0, step=1, limit=6
    $region2: #{tpu_custom_call.1} parent=1 // loop_pre_header
      _
    $region3: #{tpu_custom_call.1} parent=1 // loop_header
      %s15 = sphi 0, %s19
      %p16 = scmp.ge.s32.totalorder %s15, 6
      %s22 = sphi 0, %s34
      %s23 = sphi 0, %s30
      %s24 = sphi 0, %s22
      %s25 = sphi 0, %s23
      %s26 = sphi 0, %s24
      %s27 = sphi 0, %s25
      %s37 = sphi 0, %s39
      %s40 = sphi 0, %s37
      %s41 = sphi 0, %s40
      %s57 = sphi 0, %s41
      %s61 = sphi 0, %s61
      %s63 = sphi 0, %s61
      %s64 = sphi 0, %s63
      %s78 = sphi 0, %s64
      %s82 = sphi 0, %s82
      %s84 = sphi 0, %s82
      %s85 = sphi 0, %s84
      %s99 = sphi 0, %s85
      %s103 = sphi 0, %s103
      %s105 = sphi 0, %s103
      %s106 = sphi 0, %s105
      %s120 = sphi 0, %s106
      %s124 = sphi 0, %s124
      %s126 = sphi 0, %s124
      %s127 = sphi 0, %s126
      %s141 = sphi 0, %s127
      %s145 = sphi 0, %s145
      %s147 = sphi 0, %s145
      %s148 = sphi 0, %s147
      %s162 = sphi 0, %s148
      %s170 = sphi 0, %s172
      %s173 = sphi 0, %s170
      %s174 = sphi 0, %s173
      %s190 = sphi 0, %s174
    $region4: #{tpu_custom_call.1} parent=1 // loop_header_branch
      %18 = sbr.rel (%p16) target = $region8
    $region5: #{tpu_custom_call.1} parent=1 // loop_body
      %s20 = ssub.s32 %s15, 1
      %s21 = ssub.s32 %s15, 2
      %s28 = sadd.s32 1, %s23
      %p29 = scmp.ge.s32.totalorder %s28, 2
      %s30 = scalar_select %p29, 0, %s28
      %s31 = sadd.s32 1, %s22
      %s32 = scalar_select %p29, %s31, %s22
      %p33 = scmp.ge.s32.totalorder %s32, 2
      %s34 = scalar_select %p33, 0, %s32
      %s35 = ssub.s32 %s22, %s34
      %p36 = scmp.eq.s32.totalorder %s35, 0
      %s38 = sadd.s32 %s37, 1
      %s39 = scalar_select %p36, %s37, %s38
      %p42 = pneg %p36
      %p43 = scmp.eq.s32.totalorder %s15, 3
      %p44 = por %p42, %p43
      %p45 = scmp.ne.s32.totalorder %s37, %s40
      %p46 = scmp.eq.s32.totalorder %s15, 0
      %p47 = por %p45, %p46
      %p48 = scmp.ne.s32.totalorder %s37, %s40
      %p49 = scmp.eq.s32.totalorder %s20, 3
      %p50 = por %p48, %p49
      %p51 = scmp.ne.s32.totalorder %s40, %s41
      %p52 = scmp.eq.s32.totalorder %s20, 0
      %p53 = por %p51, %p52
      %p54 = scmp.ne.s32.totalorder %s40, %s41
      %p55 = scmp.eq.s32.totalorder %s21, 3
      %p56 = por %p54, %p55
      %p58 = scmp.ne.s32.totalorder %s41, %s57
      %p59 = scmp.eq.s32.totalorder %s21, 0
      %p60 = por %p58, %p59
      %s62 = sadd.s32 %s61, 1
      %p65 = scmp.eq.s32.totalorder %s15, 3
      %p66 = scmp.ne.s32.totalorder %s61, %s63
      %p67 = scmp.eq.s32.totalorder %s15, 0
      %p68 = por %p66, %p67
      %p69 = scmp.ne.s32.totalorder %s61, %s63
      %p70 = scmp.eq.s32.totalorder %s20, 3
      %p71 = por %p69, %p70
      %p72 = scmp.ne.s32.totalorder %s63, %s64
      %p73 = scmp.eq.s32.totalorder %s20, 0
      %p74 = por %p72, %p73
      %p75 = scmp.ne.s32.totalorder %s63, %s64
      %p76 = scmp.eq.s32.totalorder %s21, 3
      %p77 = por %p75, %p76
      %p79 = scmp.ne.s32.totalorder %s64, %s78
      %p80 = scmp.eq.s32.totalorder %s21, 0
      %p81 = por %p79, %p80
      %s83 = sadd.s32 %s82, 1
      %p86 = scmp.eq.s32.totalorder %s15, 3
      %p87 = scmp.ne.s32.totalorder %s82, %s84
      %p88 = scmp.eq.s32.totalorder %s15, 0
      %p89 = por %p87, %p88
      %p90 = scmp.ne.s32.totalorder %s82, %s84
      %p91 = scmp.eq.s32.totalorder %s20, 3
      %p92 = por %p90, %p91
      %p93 = scmp.ne.s32.totalorder %s84, %s85
      %p94 = scmp.eq.s32.totalorder %s20, 0
      %p95 = por %p93, %p94
      %p96 = scmp.ne.s32.totalorder %s84, %s85
      %p97 = scmp.eq.s32.totalorder %s21, 3
      %p98 = por %p96, %p97
      %p100 = scmp.ne.s32.totalorder %s85, %s99
      %p101 = scmp.eq.s32.totalorder %s21, 0
      %p102 = por %p100, %p101
      %s104 = sadd.s32 %s103, 1
      %p107 = scmp.eq.s32.totalorder %s15, 3
      %p108 = scmp.ne.s32.totalorder %s103, %s105
      %p109 = scmp.eq.s32.totalorder %s15, 0
      %p110 = por %p108, %p109
      %p111 = scmp.ne.s32.totalorder %s103, %s105
      %p112 = scmp.eq.s32.totalorder %s20, 3
      %p113 = por %p111, %p112
      %p114 = scmp.ne.s32.totalorder %s105, %s106
      %p115 = scmp.eq.s32.totalorder %s20, 0
      %p116 = por %p114, %p115
      %p117 = scmp.ne.s32.totalorder %s105, %s106
      %p118 = scmp.eq.s32.totalorder %s21, 3
      %p119 = por %p117, %p118
      %p121 = scmp.ne.s32.totalorder %s106, %s120
      %p122 = scmp.eq.s32.totalorder %s21, 0
      %p123 = por %p121, %p122
      %s125 = sadd.s32 %s124, 1
      %p128 = scmp.eq.s32.totalorder %s15, 3
      %p129 = scmp.ne.s32.totalorder %s124, %s126
      %p130 = scmp.eq.s32.totalorder %s15, 0
      %p131 = por %p129, %p130
      %p132 = scmp.ne.s32.totalorder %s124, %s126
      %p133 = scmp.eq.s32.totalorder %s20, 3
      %p134 = por %p132, %p133
      %p135 = scmp.ne.s32.totalorder %s126, %s127
      %p136 = scmp.eq.s32.totalorder %s20, 0
      %p137 = por %p135, %p136
      %p138 = scmp.ne.s32.totalorder %s126, %s127
      %p139 = scmp.eq.s32.totalorder %s21, 3
      %p140 = por %p138, %p139
      %p142 = scmp.ne.s32.totalorder %s127, %s141
      %p143 = scmp.eq.s32.totalorder %s21, 0
      %p144 = por %p142, %p143
      %s146 = sadd.s32 %s145, 1
      %p149 = scmp.eq.s32.totalorder %s15, 3
      %p150 = scmp.ne.s32.totalorder %s145, %s147
      %p151 = scmp.eq.s32.totalorder %s15, 0
      %p152 = por %p150, %p151
      %p153 = scmp.ne.s32.totalorder %s145, %s147
      %p154 = scmp.eq.s32.totalorder %s20, 3
      %p155 = por %p153, %p154
      %p156 = scmp.ne.s32.totalorder %s147, %s148
      %p157 = scmp.eq.s32.totalorder %s20, 0
      %p158 = por %p156, %p157
      %p159 = scmp.ne.s32.totalorder %s147, %s148
      %p160 = scmp.eq.s32.totalorder %s21, 3
      %p161 = por %p159, %p160
      %p163 = scmp.ne.s32.totalorder %s148, %s162
      %p164 = scmp.eq.s32.totalorder %s21, 0
      %p165 = por %p163, %p164
      %s166 = ssub.s32 %s22, %s34
      %s167 = ssub.s32 %s23, %s30
      %s168 = sor.u32 %s166, %s167
      %p169 = scmp.eq.s32.totalorder %s168, 0
      %s171 = sadd.s32 %s170, 1
      %s172 = scalar_select %p169, %s170, %s171
      %p175 = pneg %p169
      %p176 = scmp.eq.s32.totalorder %s15, 3
      %p177 = por %p175, %p176
      %p178 = scmp.ne.s32.totalorder %s170, %s173
      %p179 = scmp.eq.s32.totalorder %s15, 0
      %p180 = por %p178, %p179
      %p181 = scmp.ne.s32.totalorder %s170, %s173
      %p182 = scmp.eq.s32.totalorder %s20, 3
      %p183 = por %p181, %p182
      %p184 = scmp.ne.s32.totalorder %s173, %s174
      %p185 = scmp.eq.s32.totalorder %s20, 0
      %p186 = por %p184, %p185
      %p187 = scmp.ne.s32.totalorder %s173, %s174
      %p188 = scmp.eq.s32.totalorder %s21, 3
      %p189 = por %p187, %p188
      %p191 = scmp.ne.s32.totalorder %s174, %s190
      %p192 = scmp.eq.s32.totalorder %s21, 0
      %p193 = por %p191, %p192
      %p194 = scmp.le.s32.totalorder 1, %s15
      %p195 = scmp.lt.s32.totalorder %s15, 5
      %p196 = pnand %p194, %p195
      %p197 = pneg %p196
      // Predicated region
      $region9: #{tpu_custom_call.1} parent=5 // pred_check
        _
      $region10: #{tpu_custom_call.1} parent=5 // pred_check_branch
        %199 = sbr.rel (%p196) target = $region12
      $region11: #{tpu_custom_call.1} parent=5 // pred_region
        %s200 = ssub.s32 %s15, 1
        // Predicated region
        $region13: #{tpu_custom_call.1} parent=11 // pred_check
          %p201 = pneg %p74
        $region14: #{tpu_custom_call.1} parent=11 // pred_check_branch
          %203 = sbr.rel (%p201) target = $region16
        $region15: #{tpu_custom_call.1} parent=11 // pred_region
          _
        $region16: #{tpu_custom_call.1} parent=11 // pred_fallthru
          _
        // Predicated region
        $region17: #{tpu_custom_call.1} parent=11 // pred_check
          %p204 = pneg %p95
        $region18: #{tpu_custom_call.1} parent=11 // pred_check_branch
          %206 = sbr.rel (%p204) target = $region20
        $region19: #{tpu_custom_call.1} parent=11 // pred_region
          _
        $region20: #{tpu_custom_call.1} parent=11 // pred_fallthru
          _
        // Predicated region
        $region21: #{tpu_custom_call.1} parent=11 // pred_check
          %p207 = pneg %p116
        $region22: #{tpu_custom_call.1} parent=11 // pred_check_branch
          %209 = sbr.rel (%p207) target = $region24
        $region23: #{tpu_custom_call.1} parent=11 // pred_region
          _
        $region24: #{tpu_custom_call.1} parent=11 // pred_fallthru
          _
        // Predicated region
        $region25: #{tpu_custom_call.1} parent=11 // pred_check
          %p210 = pneg %p137
        $region26: #{tpu_custom_call.1} parent=11 // pred_check_branch
          %212 = sbr.rel (%p210) target = $region28
        $region27: #{tpu_custom_call.1} parent=11 // pred_region
          _
        $region28: #{tpu_custom_call.1} parent=11 // pred_fallthru
          _
        // Predicated region
        $region29: #{tpu_custom_call.1} parent=11 // pred_check
          %p213 = pneg %p158
        $region30: #{tpu_custom_call.1} parent=11 // pred_check_branch
          %215 = sbr.rel (%p213) target = $region32
        $region31: #{tpu_custom_call.1} parent=11 // pred_region
          _
        $region32: #{tpu_custom_call.1} parent=11 // pred_fallthru
          _
      $region12: #{tpu_custom_call.1} parent=5 // pred_fallthru
        _
      %p216 = scmp.lt.s32.totalorder %s15, 4
      // Predicated region
      $region33: #{tpu_custom_call.1} parent=5 // pred_check
        %p217 = pneg %p216
      $region34: #{tpu_custom_call.1} parent=5 // pred_check_branch
        %219 = sbr.rel (%p217) target = $region36
      $region35: #{tpu_custom_call.1} parent=5 // pred_region
        // Predicated region
        $region37: #{tpu_custom_call.1} parent=35 // pred_check
          %p220 = pneg %p47
        $region38: #{tpu_custom_call.1} parent=35 // pred_check_branch
          %222 = sbr.rel (%p220) target = $region40
        $region39: #{tpu_custom_call.1} parent=35 // pred_region
          %p223 = scmp.lt.s32.totalorder %s22, 1
          %s224 = scalar_select %p223, %s22, 1
          %s225 = smul.addr %s224, 40
          %s226 = smul.addr %s225, 4
          %s227 = scalar_lea.vmem %s0, %s226
        $region40: #{tpu_custom_call.1} parent=35 // pred_fallthru
          _
      $region36: #{tpu_custom_call.1} parent=5 // pred_fallthru
        _
      %p228 = scmp.le.s32.totalorder 1, %s15
      %p229 = scmp.lt.s32.totalorder %s15, 5
      %p230 = pnand %p228, %p229
      %p231 = pneg %p230
      // Predicated region
      $region41: #{tpu_custom_call.1} parent=5 // pred_check
        _
      $region42: #{tpu_custom_call.1} parent=5 // pred_check_branch
        %233 = sbr.rel (%p230) target = $region44
      $region43: #{tpu_custom_call.1} parent=5 // pred_region
        %s234 = ssub.s32 %s15, 1
        %p235 = scmp.lt.s32.totalorder %s24, 1
        %s236 = scalar_select %p235, %s24, 1
        %s237 = smul.addr %s236, 40
        %s238 = smul.addr %s237, 4
        %s239 = scalar_lea.vmem %s0, %s238
        %p240 = pneg %p53
        %p241 = pneg %p50
        %p242 = pneg %p74
        %p243 = pneg %p71
        %p244 = pneg %p95
        %p245 = pneg %p92
        %p246 = pneg %p116
        %p247 = pneg %p113
        %p248 = pneg %p137
        %p249 = pneg %p134
        %p250 = pneg %p158
        %p251 = pneg %p155
        %p252 = pneg %p186
        %p253 = pneg %p183
        %s254 = sand.u32 %s173, 1
        %s255 = scalar_lea.sflag [#allocation4], %s254
        %s256 = sand.u32 %s173, 1
        %s257 = smul.addr %s256, 64
        %s258 = scalar_lea.vmem [#allocation3], %s257
        %p259 = scmp.lt.s32.totalorder %s24, 1
        %s260 = scalar_select %p259, %s24, 1
        %s261 = smul.addr %s260, 40
        %s262 = smul.addr %s261, 4
        %s263 = scalar_lea.vmem %s0, %s262
        %s264 = smul.u32 8, %s25
        %s266 = smul.u32 %s25, 8
        %s267 = smul.u32 %s266, 2
        %s268 = smul.addr %s267, 4
        %s269 = scalar_lea.vmem %s263, %s268
        %v270 = vld [vmem:[%s269] sm:$0xf]
        %v271 = vld [vmem:[%s269 + $0x4] sm:$0xf]
        %v272 = vld [vmem:[%s269 + $0x8] sm:$0xf]
        %v273 = vld [vmem:[%s269 + $0xc] sm:$0xf]
        %v274 = vld [vmem:[%s269 + $0x10] sm:$0xf]
        %v275 = vld [vmem:[%s269 + $0x14] sm:$0xf]
        %v276 = vld [vmem:[%s269 + $0x18] sm:$0xf]
        %v277 = vld [vmem:[%s269 + $0x1c] sm:$0xf]
        %v278 = vld [vmem:[%s269 + $0x20] sm:$0xf]
        %v279 = vld [vmem:[%s269 + $0x24] sm:$0xf]
        %v280 = vld [vmem:[%s269 + $0x28] sm:$0xf]
        %v281 = vld [vmem:[%s269 + $0x2c] sm:$0xf]
        %v282 = vld [vmem:[%s269 + $0x30] sm:$0xf]
        %v283 = vld [vmem:[%s269 + $0x34] sm:$0xf]
        %v284 = vld [vmem:[%s269 + $0x38] sm:$0xf]
        %v285 = vld [vmem:[%s269 + $0x3c] sm:$0xf]
        %v286 = vld [vmem:[%s269 + $0x40] sm:$0xf]
        %v287 = vld [vmem:[%s269 + $0x44] sm:$0xf]
        %v288 = vld [vmem:[%s269 + $0x48] sm:$0xf]
        %v289 = vld [vmem:[%s269 + $0x4c] sm:$0xf]
        %v290 = vld [vmem:[%s269 + $0x50] sm:$0xf]
        %v291 = vld [vmem:[%s269 + $0x54] sm:$0xf]
        %v292 = vld [vmem:[%s269 + $0x58] sm:$0xf]
        %v293 = vld [vmem:[%s269 + $0x5c] sm:$0xf]
        %v318 = vunpack.c.l.b16 %v270
        %v319 = vunpack.c.l.b16 %v271
        %v320 = vunpack.c.l.b16 %v272
        %v321 = vunpack.c.l.b16 %v273
        %v322 = vunpack.c.l.b16 %v274
        %v323 = vunpack.c.l.b16 %v275
        %v324 = vunpack.c.l.b16 %v276
        %v325 = vunpack.c.l.b16 %v277
        %v326 = vunpack.c.l.b16 %v278
        %v327 = vunpack.c.l.b16 %v279
        %v328 = vunpack.c.l.b16 %v280
        %v329 = vunpack.c.l.b16 %v281
        %v330 = vunpack.c.l.b16 %v282
        %v331 = vunpack.c.l.b16 %v283
        %v332 = vunpack.c.l.b16 %v284
        %v333 = vunpack.c.l.b16 %v285
        %v334 = vunpack.c.l.b16 %v286
        %v335 = vunpack.c.l.b16 %v287
        %v336 = vunpack.c.l.b16 %v288
        %v337 = vunpack.c.l.b16 %v289
        %v338 = vunpack.c.l.b16 %v290
        %v339 = vunpack.c.l.b16 %v291
        %v340 = vunpack.c.l.b16 %v292
        %v341 = vunpack.c.l.b16 %v293
        %v342 = vpack.c.b16 %v319, %v318
        %v343 = vpack.c.b16 %v321, %v320
        %v344 = vpack.c.b16 %v323, %v322
        %v345 = vpack.c.b16 %v325, %v324
        %v346 = vpack.c.b16 %v327, %v326
        %v347 = vpack.c.b16 %v329, %v328
        %v348 = vpack.c.b16 %v331, %v330
        %v349 = vpack.c.b16 %v333, %v332
        %v350 = vpack.c.b16 %v335, %v334
        %v351 = vpack.c.b16 %v337, %v336
        %v352 = vpack.c.b16 %v339, %v338
        %v353 = vpack.c.b16 %v341, %v340
        %v355 = vshrl.u32 %v342, 16
        %v357 = vrot.slane %v355, 7
        %v358 = vshll.u32 %v342, 16
        %v360 = vor.u32 %v357, %v358
        %v362 = vshrl.u32 %v343, 16
        %v364 = vrot.slane %v362, 7
        %v365 = vshll.u32 %v343, 16
        %v367 = vor.u32 %v364, %v365
        %v369 = vshrl.u32 %v344, 16
        %v371 = vrot.slane %v369, 7
        %v372 = vshll.u32 %v344, 16
        %v374 = vor.u32 %v371, %v372
        %v376 = vshrl.u32 %v345, 16
        %v378 = vrot.slane %v376, 7
        %v379 = vshll.u32 %v345, 16
        %v381 = vor.u32 %v378, %v379
        %v383 = vshrl.u32 %v346, 16
        %v385 = vrot.slane %v383, 7
        %v386 = vshll.u32 %v346, 16
        %v388 = vor.u32 %v385, %v386
        %v390 = vshrl.u32 %v347, 16
        %v392 = vrot.slane %v390, 7
        %v393 = vshll.u32 %v347, 16
        %v395 = vor.u32 %v392, %v393
        %v397 = vshrl.u32 %v348, 16
        %v399 = vrot.slane %v397, 7
        %v400 = vshll.u32 %v348, 16
        %v402 = vor.u32 %v399, %v400
        %v404 = vshrl.u32 %v349, 16
        %v406 = vrot.slane %v404, 7
        %v407 = vshll.u32 %v349, 16
        %v409 = vor.u32 %v406, %v407
        %v411 = vshrl.u32 %v350, 16
        %v413 = vrot.slane %v411, 7
        %v414 = vshll.u32 %v350, 16
        %v416 = vor.u32 %v413, %v414
        %v418 = vshrl.u32 %v351, 16
        %v420 = vrot.slane %v418, 7
        %v421 = vshll.u32 %v351, 16
        %v423 = vor.u32 %v420, %v421
        %v425 = vshrl.u32 %v352, 16
        %v427 = vrot.slane %v425, 7
        %v428 = vshll.u32 %v352, 16
        %v430 = vor.u32 %v427, %v428
        %v432 = vshrl.u32 %v353, 16
        %v434 = vrot.slane %v432, 7
        %v435 = vshll.u32 %v353, 16
        %v437 = vor.u32 %v434, %v435
        %vm450 = vcmask 1040384
        %vm451 = vsmask.f32 256
        %vm452 = vmand %vm450, %vm451
        %v453 = vsel %vm452, 0, %v360
        %v454 = vsel %vm452, 0, %v367
        %v455 = vsel %vm452, 0, %v374
        %v456 = vsel %vm452, 0, %v381
        %v457 = vsel %vm452, 0, %v388
        %v458 = vsel %vm452, 0, %v395
        %v459 = vsel %vm452, 0, %v402
        %v460 = vsel %vm452, 0, %v409
        %v461 = vsel %vm452, 0, %v416
        %v462 = vsel %vm452, 0, %v423
        %v463 = vsel %vm452, 0, %v430
        %v464 = vsel %vm452, 0, %v437
        %v465 = vrot.slane %v358, 1
        %v466 = vor.u32 %v355, %v465
        %v467 = vrot.slane %v365, 1
        %v468 = vor.u32 %v362, %v467
        %v469 = vrot.slane %v372, 1
        %v470 = vor.u32 %v369, %v469
        %v471 = vrot.slane %v379, 1
        %v472 = vor.u32 %v376, %v471
        %v473 = vrot.slane %v386, 1
        %v474 = vor.u32 %v383, %v473
        %v475 = vrot.slane %v393, 1
        %v476 = vor.u32 %v390, %v475
        %v477 = vrot.slane %v400, 1
        %v478 = vor.u32 %v397, %v477
        %v479 = vrot.slane %v407, 1
        %v480 = vor.u32 %v404, %v479
        %v481 = vrot.slane %v414, 1
        %v482 = vor.u32 %v411, %v481
        %v483 = vrot.slane %v421, 1
        %v484 = vor.u32 %v418, %v483
        %v485 = vrot.slane %v428, 1
        %v486 = vor.u32 %v425, %v485
        %v487 = vrot.slane %v435, 1
        %v488 = vor.u32 %v432, %v487
        %vm501 = vcmask 1047552
        %vm502 = vsmask.f32 7424
        %vm503 = vmand %vm501, %vm502
        %v504 = vsel %vm503, %v466, 0
        %v505 = vsel %vm503, %v468, 0
        %v506 = vsel %vm503, %v470, 0
        %v507 = vsel %vm503, %v472, 0
        %v508 = vsel %vm503, %v474, 0
        %v509 = vsel %vm503, %v476, 0
        %v510 = vsel %vm503, %v478, 0
        %v511 = vsel %vm503, %v480, 0
        %v512 = vsel %vm503, %v482, 0
        %v513 = vsel %vm503, %v484, 0
        %v514 = vsel %vm503, %v486, 0
        %v515 = vsel %vm503, %v488, 0
        %v516 = vld [vmem:[%s1] sm:$0x3]
        %s517 = scalar_lea.vmem %s1, 2
        %v518 = vld [vmem:[%s517] sm:$0x3]
        %vm519 = vcmask 31744
        %v520 = vsel %vm519, %v342, 0
        %v522 = vsel %vm519, %v343, 0
        %v524 = vsel %vm519, %v344, 0
        %v526 = vsel %vm519, %v345, 0
        %v528 = vsel %vm519, %v346, 0
        %v530 = vsel %vm519, %v347, 0
        %v532 = vsel %vm519, %v348, 0
        %v534 = vsel %vm519, %v349, 0
        %v536 = vsel %vm519, %v350, 0
        %v538 = vsel %vm519, %v351, 0
        %vm540 = vcmask 1041408
        %v542 = vsel %vm540, %v518, 0
        %544 = vmatpush.bf16.msra.mxu0 0
        %545 = vmatpush.bf16.msra.mxu0 0
        %546 = vmatpush.bf16.msra.mxu0 0
        %547 = vmatpush.bf16.msra.mxu0 0
        %548 = vmatpush.bf16.msra.mxu0 0
        %549 = vmatpush.bf16.msra.mxu0 0
        %550 = vmatpush.bf16.msra.mxu0 0
        %551 = vmatpush.bf16.msra.mxu0 %v542
        %552 = vmatmul.bf16.gmra.mxu0 %v520
        %v553 = vpop.f32.mrf.mxu0
        %v554 = vadd.f32 0.0, %v553
        %v555 = vpop.f32.mrf.mxu0
        %v556 = vadd.f32 0.0, %v555
        %557 = vmatmul.bf16.gmra.mxu0 %v522
        %v558 = vpop.f32.mrf.mxu0
        %v559 = vadd.f32 0.0, %v558
        %v560 = vpop.f32.mrf.mxu0
        %v561 = vadd.f32 0.0, %v560
        %562 = vmatmul.bf16.gmra.mxu0 %v524
        %v563 = vpop.f32.mrf.mxu0
        %v564 = vadd.f32 0.0, %v563
        %v565 = vpop.f32.mrf.mxu0
        %v566 = vadd.f32 0.0, %v565
        %567 = vmatmul.bf16.gmra.mxu0 %v526
        %v568 = vpop.f32.mrf.mxu0
        %v569 = vadd.f32 0.0, %v568
        %v570 = vpop.f32.mrf.mxu0
        %v571 = vadd.f32 0.0, %v570
        %572 = vmatmul.bf16.gmra.mxu0 %v528
        %v573 = vpop.f32.mrf.mxu0
        %v574 = vadd.f32 0.0, %v573
        %v575 = vpop.f32.mrf.mxu0
        %v576 = vadd.f32 0.0, %v575
        %577 = vmatmul.bf16.gmra.mxu0 %v530
        %v578 = vpop.f32.mrf.mxu0
        %v579 = vadd.f32 0.0, %v578
        %v580 = vpop.f32.mrf.mxu0
        %v581 = vadd.f32 0.0, %v580
        %582 = vmatmul.bf16.gmra.mxu0 %v532
        %v583 = vpop.f32.mrf.mxu0
        %v584 = vadd.f32 0.0, %v583
        %v585 = vpop.f32.mrf.mxu0
        %v586 = vadd.f32 0.0, %v585
        %587 = vmatmul.bf16.gmra.mxu0 %v534
        %v588 = vpop.f32.mrf.mxu0
        %v589 = vadd.f32 0.0, %v588
        %v590 = vpop.f32.mrf.mxu0
        %v591 = vadd.f32 0.0, %v590
        %592 = vmatmul.bf16.gmra.mxu0 %v536
        %v593 = vpop.f32.mrf.mxu0
        %v594 = vadd.f32 0.0, %v593
        %v595 = vpop.f32.mrf.mxu0
        %v596 = vadd.f32 0.0, %v595
        %597 = vmatmul.bf16.gmra.mxu0 %v538
        %v598 = vpop.f32.mrf.mxu0
        %v599 = vadd.f32 0.0, %v598
        %v600 = vpop.f32.mrf.mxu0
        %v601 = vadd.f32 0.0, %v600
        %602 = vdwg.mxu0
        %v604 = vsel %vm519, %v453, 0
        %v607 = vsel %vm519, %v454, 0
        %v610 = vsel %vm519, %v455, 0
        %v613 = vsel %vm519, %v456, 0
        %v616 = vsel %vm519, %v457, 0
        %v619 = vsel %vm519, %v458, 0
        %v622 = vsel %vm519, %v459, 0
        %v625 = vsel %vm519, %v460, 0
        %v628 = vsel %vm519, %v461, 0
        %v631 = vsel %vm519, %v462, 0
        %v634 = vsel %vm540, %v516, 0
        %636 = vmatpush.bf16.msra.mxu0 0
        %637 = vmatpush.bf16.msra.mxu0 0
        %638 = vmatpush.bf16.msra.mxu0 0
        %639 = vmatpush.bf16.msra.mxu0 0
        %640 = vmatpush.bf16.msra.mxu0 0
        %641 = vmatpush.bf16.msra.mxu0 0
        %642 = vmatpush.bf16.msra.mxu0 0
        %643 = vmatpush.bf16.msra.mxu0 %v634
        %644 = vmatmul.bf16.gmra.mxu0 %v604
        %v645 = vpop.f32.mrf.mxu0
        %v646 = vadd.f32 %v554, %v645
        %v647 = vpop.f32.mrf.mxu0
        %v648 = vadd.f32 %v556, %v647
        %649 = vmatmul.bf16.gmra.mxu0 %v607
        %v650 = vpop.f32.mrf.mxu0
        %v651 = vadd.f32 %v559, %v650
        %v652 = vpop.f32.mrf.mxu0
        %v653 = vadd.f32 %v561, %v652
        %654 = vmatmul.bf16.gmra.mxu0 %v610
        %v655 = vpop.f32.mrf.mxu0
        %v656 = vadd.f32 %v564, %v655
        %v657 = vpop.f32.mrf.mxu0
        %v658 = vadd.f32 %v566, %v657
        %659 = vmatmul.bf16.gmra.mxu0 %v613
        %v660 = vpop.f32.mrf.mxu0
        %v661 = vadd.f32 %v569, %v660
        %v662 = vpop.f32.mrf.mxu0
        %v663 = vadd.f32 %v571, %v662
        %664 = vmatmul.bf16.gmra.mxu0 %v616
        %v665 = vpop.f32.mrf.mxu0
        %v666 = vadd.f32 %v574, %v665
        %v667 = vpop.f32.mrf.mxu0
        %v668 = vadd.f32 %v576, %v667
        %669 = vmatmul.bf16.gmra.mxu0 %v619
        %v670 = vpop.f32.mrf.mxu0
        %v671 = vadd.f32 %v579, %v670
        %v672 = vpop.f32.mrf.mxu0
        %v673 = vadd.f32 %v581, %v672
        %674 = vmatmul.bf16.gmra.mxu0 %v622
        %v675 = vpop.f32.mrf.mxu0
        %v676 = vadd.f32 %v584, %v675
        %v677 = vpop.f32.mrf.mxu0
        %v678 = vadd.f32 %v586, %v677
        %679 = vmatmul.bf16.gmra.mxu0 %v625
        %v680 = vpop.f32.mrf.mxu0
        %v681 = vadd.f32 %v589, %v680
        %v682 = vpop.f32.mrf.mxu0
        %v683 = vadd.f32 %v591, %v682
        %684 = vmatmul.bf16.gmra.mxu0 %v628
        %v685 = vpop.f32.mrf.mxu0
        %v686 = vadd.f32 %v594, %v685
        %v687 = vpop.f32.mrf.mxu0
        %v688 = vadd.f32 %v596, %v687
        %689 = vmatmul.bf16.gmra.mxu0 %v631
        %v690 = vpop.f32.mrf.mxu0
        %v691 = vadd.f32 %v599, %v690
        %v692 = vpop.f32.mrf.mxu0
        %v693 = vadd.f32 %v601, %v692
        %694 = vdwg.mxu0
        %s695 = scalar_lea.vmem %s1, 4
        %v696 = vld [vmem:[%s695] sm:$0x3]
        %v698 = vsel %vm519, %v504, 0
        %v701 = vsel %vm519, %v505, 0
        %v704 = vsel %vm519, %v506, 0
        %v707 = vsel %vm519, %v507, 0
        %v710 = vsel %vm519, %v508, 0
        %v713 = vsel %vm519, %v509, 0
        %v716 = vsel %vm519, %v510, 0
        %v719 = vsel %vm519, %v511, 0
        %v722 = vsel %vm519, %v512, 0
        %v725 = vsel %vm519, %v513, 0
        %v728 = vsel %vm540, %v696, 0
        %730 = vmatpush.bf16.msra.mxu0 0
        %731 = vmatpush.bf16.msra.mxu0 0
        %732 = vmatpush.bf16.msra.mxu0 0
        %733 = vmatpush.bf16.msra.mxu0 0
        %734 = vmatpush.bf16.msra.mxu0 0
        %735 = vmatpush.bf16.msra.mxu0 0
        %736 = vmatpush.bf16.msra.mxu0 0
        %737 = vmatpush.bf16.msra.mxu0 %v728
        %738 = vmatmul.bf16.gmra.mxu0 %v698
        %v739 = vpop.f32.mrf.mxu0
        %v740 = vadd.f32 0.0, %v739
        %v741 = vpop.f32.mrf.mxu0
        %v742 = vadd.f32 0.0, %v741
        %743 = vmatmul.bf16.gmra.mxu0 %v701
        %v744 = vpop.f32.mrf.mxu0
        %v745 = vadd.f32 0.0, %v744
        %v746 = vpop.f32.mrf.mxu0
        %v747 = vadd.f32 0.0, %v746
        %748 = vmatmul.bf16.gmra.mxu0 %v704
        %v749 = vpop.f32.mrf.mxu0
        %v750 = vadd.f32 0.0, %v749
        %v751 = vpop.f32.mrf.mxu0
        %v752 = vadd.f32 0.0, %v751
        %753 = vmatmul.bf16.gmra.mxu0 %v707
        %v754 = vpop.f32.mrf.mxu0
        %v755 = vadd.f32 0.0, %v754
        %v756 = vpop.f32.mrf.mxu0
        %v757 = vadd.f32 0.0, %v756
        %758 = vmatmul.bf16.gmra.mxu0 %v710
        %v759 = vpop.f32.mrf.mxu0
        %v760 = vadd.f32 0.0, %v759
        %v761 = vpop.f32.mrf.mxu0
        %v762 = vadd.f32 0.0, %v761
        %763 = vmatmul.bf16.gmra.mxu0 %v713
        %v764 = vpop.f32.mrf.mxu0
        %v765 = vadd.f32 0.0, %v764
        %v766 = vpop.f32.mrf.mxu0
        %v767 = vadd.f32 0.0, %v766
        %768 = vmatmul.bf16.gmra.mxu0 %v716
        %v769 = vpop.f32.mrf.mxu0
        %v770 = vadd.f32 0.0, %v769
        %v771 = vpop.f32.mrf.mxu0
        %v772 = vadd.f32 0.0, %v771
        %773 = vmatmul.bf16.gmra.mxu0 %v719
        %v774 = vpop.f32.mrf.mxu0
        %v775 = vadd.f32 0.0, %v774
        %v776 = vpop.f32.mrf.mxu0
        %v777 = vadd.f32 0.0, %v776
        %778 = vmatmul.bf16.gmra.mxu0 %v722
        %v779 = vpop.f32.mrf.mxu0
        %v780 = vadd.f32 0.0, %v779
        %v781 = vpop.f32.mrf.mxu0
        %v782 = vadd.f32 0.0, %v781
        %783 = vmatmul.bf16.gmra.mxu0 %v725
        %v784 = vpop.f32.mrf.mxu0
        %v785 = vadd.f32 0.0, %v784
        %v786 = vpop.f32.mrf.mxu0
        %v787 = vadd.f32 0.0, %v786
        %788 = vdwg.mxu0
        %v789 = vadd.f32 %v646, %v740
        %v790 = vadd.f32 %v648, %v742
        %v791 = vadd.f32 %v651, %v745
        %v792 = vadd.f32 %v653, %v747
        %v793 = vadd.f32 %v656, %v750
        %v794 = vadd.f32 %v658, %v752
        %v795 = vadd.f32 %v661, %v755
        %v796 = vadd.f32 %v663, %v757
        %v797 = vadd.f32 %v666, %v760
        %v798 = vadd.f32 %v668, %v762
        %v799 = vadd.f32 %v671, %v765
        %v800 = vadd.f32 %v673, %v767
        %v801 = vadd.f32 %v676, %v770
        %v802 = vadd.f32 %v678, %v772
        %v803 = vadd.f32 %v681, %v775
        %v804 = vadd.f32 %v683, %v777
        %v805 = vadd.f32 %v686, %v780
        %v806 = vadd.f32 %v688, %v782
        %v807 = vadd.f32 %v691, %v785
        %v808 = vadd.f32 %v693, %v787
        %s809 = scalar_lea.vmem %s1, 6
        %v810 = vld [vmem:[%s809] sm:$0x3]
        %v812 = vsel %vm519, %v463, 0
        %v815 = vsel %vm540, %v810, 0
        %817 = vmatpush.bf16.msra.mxu0 0
        %818 = vmatpush.bf16.msra.mxu0 0
        %819 = vmatpush.bf16.msra.mxu0 0
        %820 = vmatpush.bf16.msra.mxu0 0
        %821 = vmatpush.bf16.msra.mxu0 0
        %822 = vmatpush.bf16.msra.mxu0 0
        %823 = vmatpush.bf16.msra.mxu0 0
        %824 = vmatpush.bf16.msra.mxu0 %v815
        %825 = vmatmul.bf16.gmra.mxu0 %v607
        %v826 = vpop.f32.mrf.mxu0
        %v827 = vadd.f32 0.0, %v826
        %v828 = vpop.f32.mrf.mxu0
        %v829 = vadd.f32 0.0, %v828
        %830 = vmatmul.bf16.gmra.mxu0 %v610
        %v831 = vpop.f32.mrf.mxu0
        %v832 = vadd.f32 0.0, %v831
        %v833 = vpop.f32.mrf.mxu0
        %v834 = vadd.f32 0.0, %v833
        %835 = vmatmul.bf16.gmra.mxu0 %v613
        %v836 = vpop.f32.mrf.mxu0
        %v837 = vadd.f32 0.0, %v836
        %v838 = vpop.f32.mrf.mxu0
        %v839 = vadd.f32 0.0, %v838
        %840 = vmatmul.bf16.gmra.mxu0 %v616
        %v841 = vpop.f32.mrf.mxu0
        %v842 = vadd.f32 0.0, %v841
        %v843 = vpop.f32.mrf.mxu0
        %v844 = vadd.f32 0.0, %v843
        %845 = vmatmul.bf16.gmra.mxu0 %v619
        %v846 = vpop.f32.mrf.mxu0
        %v847 = vadd.f32 0.0, %v846
        %v848 = vpop.f32.mrf.mxu0
        %v849 = vadd.f32 0.0, %v848
        %850 = vmatmul.bf16.gmra.mxu0 %v622
        %v851 = vpop.f32.mrf.mxu0
        %v852 = vadd.f32 0.0, %v851
        %v853 = vpop.f32.mrf.mxu0
        %v854 = vadd.f32 0.0, %v853
        %855 = vmatmul.bf16.gmra.mxu0 %v625
        %v856 = vpop.f32.mrf.mxu0
        %v857 = vadd.f32 0.0, %v856
        %v858 = vpop.f32.mrf.mxu0
        %v859 = vadd.f32 0.0, %v858
        %860 = vmatmul.bf16.gmra.mxu0 %v628
        %v861 = vpop.f32.mrf.mxu0
        %v862 = vadd.f32 0.0, %v861
        %v863 = vpop.f32.mrf.mxu0
        %v864 = vadd.f32 0.0, %v863
        %865 = vmatmul.bf16.gmra.mxu0 %v631
        %v866 = vpop.f32.mrf.mxu0
        %v867 = vadd.f32 0.0, %v866
        %v868 = vpop.f32.mrf.mxu0
        %v869 = vadd.f32 0.0, %v868
        %870 = vmatmul.bf16.gmra.mxu0 %v812
        %v871 = vpop.f32.mrf.mxu0
        %v872 = vadd.f32 0.0, %v871
        %v873 = vpop.f32.mrf.mxu0
        %v874 = vadd.f32 0.0, %v873
        %875 = vdwg.mxu0
        %v876 = vadd.f32 %v789, %v827
        %v877 = vadd.f32 %v790, %v829
        %v878 = vadd.f32 %v791, %v832
        %v879 = vadd.f32 %v792, %v834
        %v880 = vadd.f32 %v793, %v837
        %v881 = vadd.f32 %v794, %v839
        %v882 = vadd.f32 %v795, %v842
        %v883 = vadd.f32 %v796, %v844
        %v884 = vadd.f32 %v797, %v847
        %v885 = vadd.f32 %v798, %v849
        %v886 = vadd.f32 %v799, %v852
        %v887 = vadd.f32 %v800, %v854
        %v888 = vadd.f32 %v801, %v857
        %v889 = vadd.f32 %v802, %v859
        %v890 = vadd.f32 %v803, %v862
        %v891 = vadd.f32 %v804, %v864
        %v892 = vadd.f32 %v805, %v867
        %v893 = vadd.f32 %v806, %v869
        %v894 = vadd.f32 %v807, %v872
        %v895 = vadd.f32 %v808, %v874
        %s896 = scalar_lea.vmem %s1, 8
        %v897 = vld [vmem:[%s896] sm:$0x3]
        %v898 = vsel %vm519, %v352, 0
        %v901 = vsel %vm540, %v897, 0
        %903 = vmatpush.bf16.msra.mxu0 0
        %904 = vmatpush.bf16.msra.mxu0 0
        %905 = vmatpush.bf16.msra.mxu0 0
        %906 = vmatpush.bf16.msra.mxu0 0
        %907 = vmatpush.bf16.msra.mxu0 0
        %908 = vmatpush.bf16.msra.mxu0 0
        %909 = vmatpush.bf16.msra.mxu0 0
        %910 = vmatpush.bf16.msra.mxu0 %v901
        %911 = vmatmul.bf16.gmra.mxu0 %v522
        %v912 = vpop.f32.mrf.mxu0
        %v913 = vadd.f32 0.0, %v912
        %v914 = vpop.f32.mrf.mxu0
        %v915 = vadd.f32 0.0, %v914
        %916 = vmatmul.bf16.gmra.mxu0 %v524
        %v917 = vpop.f32.mrf.mxu0
        %v918 = vadd.f32 0.0, %v917
        %v919 = vpop.f32.mrf.mxu0
        %v920 = vadd.f32 0.0, %v919
        %921 = vmatmul.bf16.gmra.mxu0 %v526
        %v922 = vpop.f32.mrf.mxu0
        %v923 = vadd.f32 0.0, %v922
        %v924 = vpop.f32.mrf.mxu0
        %v925 = vadd.f32 0.0, %v924
        %926 = vmatmul.bf16.gmra.mxu0 %v528
        %v927 = vpop.f32.mrf.mxu0
        %v928 = vadd.f32 0.0, %v927
        %v929 = vpop.f32.mrf.mxu0
        %v930 = vadd.f32 0.0, %v929
        %931 = vmatmul.bf16.gmra.mxu0 %v530
        %v932 = vpop.f32.mrf.mxu0
        %v933 = vadd.f32 0.0, %v932
        %v934 = vpop.f32.mrf.mxu0
        %v935 = vadd.f32 0.0, %v934
        %936 = vmatmul.bf16.gmra.mxu0 %v532
        %v937 = vpop.f32.mrf.mxu0
        %v938 = vadd.f32 0.0, %v937
        %v939 = vpop.f32.mrf.mxu0
        %v940 = vadd.f32 0.0, %v939
        %941 = vmatmul.bf16.gmra.mxu0 %v534
        %v942 = vpop.f32.mrf.mxu0
        %v943 = vadd.f32 0.0, %v942
        %v944 = vpop.f32.mrf.mxu0
        %v945 = vadd.f32 0.0, %v944
        %946 = vmatmul.bf16.gmra.mxu0 %v536
        %v947 = vpop.f32.mrf.mxu0
        %v948 = vadd.f32 0.0, %v947
        %v949 = vpop.f32.mrf.mxu0
        %v950 = vadd.f32 0.0, %v949
        %951 = vmatmul.bf16.gmra.mxu0 %v538
        %v952 = vpop.f32.mrf.mxu0
        %v953 = vadd.f32 0.0, %v952
        %v954 = vpop.f32.mrf.mxu0
        %v955 = vadd.f32 0.0, %v954
        %956 = vmatmul.bf16.gmra.mxu0 %v898
        %v957 = vpop.f32.mrf.mxu0
        %v958 = vadd.f32 0.0, %v957
        %v959 = vpop.f32.mrf.mxu0
        %v960 = vadd.f32 0.0, %v959
        %961 = vdwg.mxu0
        %v962 = vadd.f32 %v876, %v913
        %v963 = vadd.f32 %v877, %v915
        %v964 = vadd.f32 %v878, %v918
        %v965 = vadd.f32 %v879, %v920
        %v966 = vadd.f32 %v880, %v923
        %v967 = vadd.f32 %v881, %v925
        %v968 = vadd.f32 %v882, %v928
        %v969 = vadd.f32 %v883, %v930
        %v970 = vadd.f32 %v884, %v933
        %v971 = vadd.f32 %v885, %v935
        %v972 = vadd.f32 %v886, %v938
        %v973 = vadd.f32 %v887, %v940
        %v974 = vadd.f32 %v888, %v943
        %v975 = vadd.f32 %v889, %v945
        %v976 = vadd.f32 %v890, %v948
        %v977 = vadd.f32 %v891, %v950
        %v978 = vadd.f32 %v892, %v953
        %v979 = vadd.f32 %v893, %v955
        %v980 = vadd.f32 %v894, %v958
        %v981 = vadd.f32 %v895, %v960
        %s982 = scalar_lea.vmem %s1, 10
        %v983 = vld [vmem:[%s982] sm:$0x3]
        %v985 = vsel %vm519, %v514, 0
        %v988 = vsel %vm540, %v983, 0
        %990 = vmatpush.bf16.msra.mxu0 0
        %991 = vmatpush.bf16.msra.mxu0 0
        %992 = vmatpush.bf16.msra.mxu0 0
        %993 = vmatpush.bf16.msra.mxu0 0
        %994 = vmatpush.bf16.msra.mxu0 0
        %995 = vmatpush.bf16.msra.mxu0 0
        %996 = vmatpush.bf16.msra.mxu0 0
        %997 = vmatpush.bf16.msra.mxu0 %v988
        %998 = vmatmul.bf16.gmra.mxu0 %v701
        %v999 = vpop.f32.mrf.mxu0
        %v1000 = vadd.f32 0.0, %v999
        %v1001 = vpop.f32.mrf.mxu0
        %v1002 = vadd.f32 0.0, %v1001
        %1003 = vmatmul.bf16.gmra.mxu0 %v704
        %v1004 = vpop.f32.mrf.mxu0
        %v1005 = vadd.f32 0.0, %v1004
        %v1006 = vpop.f32.mrf.mxu0
        %v1007 = vadd.f32 0.0, %v1006
        %1008 = vmatmul.bf16.gmra.mxu0 %v707
        %v1009 = vpop.f32.mrf.mxu0
        %v1010 = vadd.f32 0.0, %v1009
        %v1011 = vpop.f32.mrf.mxu0
        %v1012 = vadd.f32 0.0, %v1011
        %1013 = vmatmul.bf16.gmra.mxu0 %v710
        %v1014 = vpop.f32.mrf.mxu0
        %v1015 = vadd.f32 0.0, %v1014
        %v1016 = vpop.f32.mrf.mxu0
        %v1017 = vadd.f32 0.0, %v1016
        %1018 = vmatmul.bf16.gmra.mxu0 %v713
        %v1019 = vpop.f32.mrf.mxu0
        %v1020 = vadd.f32 0.0, %v1019
        %v1021 = vpop.f32.mrf.mxu0
        %v1022 = vadd.f32 0.0, %v1021
        %1023 = vmatmul.bf16.gmra.mxu0 %v716
        %v1024 = vpop.f32.mrf.mxu0
        %v1025 = vadd.f32 0.0, %v1024
        %v1026 = vpop.f32.mrf.mxu0
        %v1027 = vadd.f32 0.0, %v1026
        %1028 = vmatmul.bf16.gmra.mxu0 %v719
        %v1029 = vpop.f32.mrf.mxu0
        %v1030 = vadd.f32 0.0, %v1029
        %v1031 = vpop.f32.mrf.mxu0
        %v1032 = vadd.f32 0.0, %v1031
        %1033 = vmatmul.bf16.gmra.mxu0 %v722
        %v1034 = vpop.f32.mrf.mxu0
        %v1035 = vadd.f32 0.0, %v1034
        %v1036 = vpop.f32.mrf.mxu0
        %v1037 = vadd.f32 0.0, %v1036
        %1038 = vmatmul.bf16.gmra.mxu0 %v725
        %v1039 = vpop.f32.mrf.mxu0
        %v1040 = vadd.f32 0.0, %v1039
        %v1041 = vpop.f32.mrf.mxu0
        %v1042 = vadd.f32 0.0, %v1041
        %1043 = vmatmul.bf16.gmra.mxu0 %v985
        %v1044 = vpop.f32.mrf.mxu0
        %v1045 = vadd.f32 0.0, %v1044
        %v1046 = vpop.f32.mrf.mxu0
        %v1047 = vadd.f32 0.0, %v1046
        %1048 = vdwg.mxu0
        %v1049 = vadd.f32 %v962, %v1000
        %v1050 = vadd.f32 %v963, %v1002
        %v1051 = vadd.f32 %v964, %v1005
        %v1052 = vadd.f32 %v965, %v1007
        %v1053 = vadd.f32 %v966, %v1010
        %v1054 = vadd.f32 %v967, %v1012
        %v1055 = vadd.f32 %v968, %v1015
        %v1056 = vadd.f32 %v969, %v1017
        %v1057 = vadd.f32 %v970, %v1020
        %v1058 = vadd.f32 %v971, %v1022
        %v1059 = vadd.f32 %v972, %v1025
        %v1060 = vadd.f32 %v973, %v1027
        %v1061 = vadd.f32 %v974, %v1030
        %v1062 = vadd.f32 %v975, %v1032
        %v1063 = vadd.f32 %v976, %v1035
        %v1064 = vadd.f32 %v977, %v1037
        %v1065 = vadd.f32 %v978, %v1040
        %v1066 = vadd.f32 %v979, %v1042
        %v1067 = vadd.f32 %v980, %v1045
        %v1068 = vadd.f32 %v981, %v1047
        %s1069 = scalar_lea.vmem %s1, 12
        %v1070 = vld [vmem:[%s1069] sm:$0x3]
        %v1072 = vsel %vm519, %v464, 0
        %v1075 = vsel %vm540, %v1070, 0
        %1077 = vmatpush.bf16.msra.mxu0 0
        %1078 = vmatpush.bf16.msra.mxu0 0
        %1079 = vmatpush.bf16.msra.mxu0 0
        %1080 = vmatpush.bf16.msra.mxu0 0
        %1081 = vmatpush.bf16.msra.mxu0 0
        %1082 = vmatpush.bf16.msra.mxu0 0
        %1083 = vmatpush.bf16.msra.mxu0 0
        %1084 = vmatpush.bf16.msra.mxu0 %v1075
        %1085 = vmatmul.bf16.gmra.mxu0 %v610
        %v1086 = vpop.f32.mrf.mxu0
        %v1087 = vadd.f32 0.0, %v1086
        %v1088 = vpop.f32.mrf.mxu0
        %v1089 = vadd.f32 0.0, %v1088
        %1090 = vmatmul.bf16.gmra.mxu0 %v613
        %v1091 = vpop.f32.mrf.mxu0
        %v1092 = vadd.f32 0.0, %v1091
        %v1093 = vpop.f32.mrf.mxu0
        %v1094 = vadd.f32 0.0, %v1093
        %1095 = vmatmul.bf16.gmra.mxu0 %v616
        %v1096 = vpop.f32.mrf.mxu0
        %v1097 = vadd.f32 0.0, %v1096
        %v1098 = vpop.f32.mrf.mxu0
        %v1099 = vadd.f32 0.0, %v1098
        %1100 = vmatmul.bf16.gmra.mxu0 %v619
        %v1101 = vpop.f32.mrf.mxu0
        %v1102 = vadd.f32 0.0, %v1101
        %v1103 = vpop.f32.mrf.mxu0
        %v1104 = vadd.f32 0.0, %v1103
        %1105 = vmatmul.bf16.gmra.mxu0 %v622
        %v1106 = vpop.f32.mrf.mxu0
        %v1107 = vadd.f32 0.0, %v1106
        %v1108 = vpop.f32.mrf.mxu0
        %v1109 = vadd.f32 0.0, %v1108
        %1110 = vmatmul.bf16.gmra.mxu0 %v625
        %v1111 = vpop.f32.mrf.mxu0
        %v1112 = vadd.f32 0.0, %v1111
        %v1113 = vpop.f32.mrf.mxu0
        %v1114 = vadd.f32 0.0, %v1113
        %1115 = vmatmul.bf16.gmra.mxu0 %v628
        %v1116 = vpop.f32.mrf.mxu0
        %v1117 = vadd.f32 0.0, %v1116
        %v1118 = vpop.f32.mrf.mxu0
        %v1119 = vadd.f32 0.0, %v1118
        %1120 = vmatmul.bf16.gmra.mxu0 %v631
        %v1121 = vpop.f32.mrf.mxu0
        %v1122 = vadd.f32 0.0, %v1121
        %v1123 = vpop.f32.mrf.mxu0
        %v1124 = vadd.f32 0.0, %v1123
        %1125 = vmatmul.bf16.gmra.mxu0 %v812
        %v1126 = vpop.f32.mrf.mxu0
        %v1127 = vadd.f32 0.0, %v1126
        %v1128 = vpop.f32.mrf.mxu0
        %v1129 = vadd.f32 0.0, %v1128
        %1130 = vmatmul.bf16.gmra.mxu0 %v1072
        %v1131 = vpop.f32.mrf.mxu0
        %v1132 = vadd.f32 0.0, %v1131
        %v1133 = vpop.f32.mrf.mxu0
        %v1134 = vadd.f32 0.0, %v1133
        %1135 = vdwg.mxu0
        %v1136 = vadd.f32 %v1049, %v1087
        %v1137 = vadd.f32 %v1050, %v1089
        %v1138 = vadd.f32 %v1051, %v1092
        %v1139 = vadd.f32 %v1052, %v1094
        %v1140 = vadd.f32 %v1053, %v1097
        %v1141 = vadd.f32 %v1054, %v1099
        %v1142 = vadd.f32 %v1055, %v1102
        %v1143 = vadd.f32 %v1056, %v1104
        %v1144 = vadd.f32 %v1057, %v1107
        %v1145 = vadd.f32 %v1058, %v1109
        %v1146 = vadd.f32 %v1059, %v1112
        %v1147 = vadd.f32 %v1060, %v1114
        %v1148 = vadd.f32 %v1061, %v1117
        %v1149 = vadd.f32 %v1062, %v1119
        %v1150 = vadd.f32 %v1063, %v1122
        %v1151 = vadd.f32 %v1064, %v1124
        %v1152 = vadd.f32 %v1065, %v1127
        %v1153 = vadd.f32 %v1066, %v1129
        %v1154 = vadd.f32 %v1067, %v1132
        %v1155 = vadd.f32 %v1068, %v1134
        %s1156 = scalar_lea.vmem %s1, 14
        %v1157 = vld [vmem:[%s1156] sm:$0x3]
        %v1158 = vsel %vm519, %v353, 0
        %v1161 = vsel %vm540, %v1157, 0
        %1163 = vmatpush.bf16.msra.mxu0 0
        %1164 = vmatpush.bf16.msra.mxu0 0
        %1165 = vmatpush.bf16.msra.mxu0 0
        %1166 = vmatpush.bf16.msra.mxu0 0
        %1167 = vmatpush.bf16.msra.mxu0 0
        %1168 = vmatpush.bf16.msra.mxu0 0
        %1169 = vmatpush.bf16.msra.mxu0 0
        %1170 = vmatpush.bf16.msra.mxu0 %v1161
        %1171 = vmatmul.bf16.gmra.mxu0 %v524
        %v1172 = vpop.f32.mrf.mxu0
        %v1173 = vadd.f32 0.0, %v1172
        %v1174 = vpop.f32.mrf.mxu0
        %v1175 = vadd.f32 0.0, %v1174
        %1176 = vmatmul.bf16.gmra.mxu0 %v526
        %v1177 = vpop.f32.mrf.mxu0
        %v1178 = vadd.f32 0.0, %v1177
        %v1179 = vpop.f32.mrf.mxu0
        %v1180 = vadd.f32 0.0, %v1179
        %1181 = vmatmul.bf16.gmra.mxu0 %v528
        %v1182 = vpop.f32.mrf.mxu0
        %v1183 = vadd.f32 0.0, %v1182
        %v1184 = vpop.f32.mrf.mxu0
        %v1185 = vadd.f32 0.0, %v1184
        %1186 = vmatmul.bf16.gmra.mxu0 %v530
        %v1187 = vpop.f32.mrf.mxu0
        %v1188 = vadd.f32 0.0, %v1187
        %v1189 = vpop.f32.mrf.mxu0
        %v1190 = vadd.f32 0.0, %v1189
        %1191 = vmatmul.bf16.gmra.mxu0 %v532
        %v1192 = vpop.f32.mrf.mxu0
        %v1193 = vadd.f32 0.0, %v1192
        %v1194 = vpop.f32.mrf.mxu0
        %v1195 = vadd.f32 0.0, %v1194
        %1196 = vmatmul.bf16.gmra.mxu0 %v534
        %v1197 = vpop.f32.mrf.mxu0
        %v1198 = vadd.f32 0.0, %v1197
        %v1199 = vpop.f32.mrf.mxu0
        %v1200 = vadd.f32 0.0, %v1199
        %1201 = vmatmul.bf16.gmra.mxu0 %v536
        %v1202 = vpop.f32.mrf.mxu0
        %v1203 = vadd.f32 0.0, %v1202
        %v1204 = vpop.f32.mrf.mxu0
        %v1205 = vadd.f32 0.0, %v1204
        %1206 = vmatmul.bf16.gmra.mxu0 %v538
        %v1207 = vpop.f32.mrf.mxu0
        %v1208 = vadd.f32 0.0, %v1207
        %v1209 = vpop.f32.mrf.mxu0
        %v1210 = vadd.f32 0.0, %v1209
        %1211 = vmatmul.bf16.gmra.mxu0 %v898
        %v1212 = vpop.f32.mrf.mxu0
        %v1213 = vadd.f32 0.0, %v1212
        %v1214 = vpop.f32.mrf.mxu0
        %v1215 = vadd.f32 0.0, %v1214
        %1216 = vmatmul.bf16.gmra.mxu0 %v1158
        %v1217 = vpop.f32.mrf.mxu0
        %v1218 = vadd.f32 0.0, %v1217
        %v1219 = vpop.f32.mrf.mxu0
        %v1220 = vadd.f32 0.0, %v1219
        %1221 = vdwg.mxu0
        %v1222 = vadd.f32 %v1136, %v1173
        %v1223 = vadd.f32 %v1137, %v1175
        %v1224 = vadd.f32 %v1138, %v1178
        %v1225 = vadd.f32 %v1139, %v1180
        %v1226 = vadd.f32 %v1140, %v1183
        %v1227 = vadd.f32 %v1141, %v1185
        %v1228 = vadd.f32 %v1142, %v1188
        %v1229 = vadd.f32 %v1143, %v1190
        %v1230 = vadd.f32 %v1144, %v1193
        %v1231 = vadd.f32 %v1145, %v1195
        %v1232 = vadd.f32 %v1146, %v1198
        %v1233 = vadd.f32 %v1147, %v1200
        %v1234 = vadd.f32 %v1148, %v1203
        %v1235 = vadd.f32 %v1149, %v1205
        %v1236 = vadd.f32 %v1150, %v1208
        %v1237 = vadd.f32 %v1151, %v1210
        %v1238 = vadd.f32 %v1152, %v1213
        %v1239 = vadd.f32 %v1153, %v1215
        %v1240 = vadd.f32 %v1154, %v1218
        %v1241 = vadd.f32 %v1155, %v1220
        %s1242 = scalar_lea.vmem %s1, 16
        %v1243 = vld [vmem:[%s1242] sm:$0x3]
        %v1245 = vsel %vm519, %v515, 0
        %v1248 = vsel %vm540, %v1243, 0
        %1250 = vmatpush.bf16.msra.mxu0 0
        %1251 = vmatpush.bf16.msra.mxu0 0
        %1252 = vmatpush.bf16.msra.mxu0 0
        %1253 = vmatpush.bf16.msra.mxu0 0
        %1254 = vmatpush.bf16.msra.mxu0 0
        %1255 = vmatpush.bf16.msra.mxu0 0
        %1256 = vmatpush.bf16.msra.mxu0 0
        %1257 = vmatpush.bf16.msra.mxu0 %v1248
        %1258 = vmatmul.bf16.gmra.mxu0 %v704
        %v1259 = vpop.f32.mrf.mxu0
        %v1260 = vadd.f32 0.0, %v1259
        %v1261 = vpop.f32.mrf.mxu0
        %v1262 = vadd.f32 0.0, %v1261
        %1263 = vmatmul.bf16.gmra.mxu0 %v707
        %v1264 = vpop.f32.mrf.mxu0
        %v1265 = vadd.f32 0.0, %v1264
        %v1266 = vpop.f32.mrf.mxu0
        %v1267 = vadd.f32 0.0, %v1266
        %1268 = vmatmul.bf16.gmra.mxu0 %v710
        %v1269 = vpop.f32.mrf.mxu0
        %v1270 = vadd.f32 0.0, %v1269
        %v1271 = vpop.f32.mrf.mxu0
        %v1272 = vadd.f32 0.0, %v1271
        %1273 = vmatmul.bf16.gmra.mxu0 %v713
        %v1274 = vpop.f32.mrf.mxu0
        %v1275 = vadd.f32 0.0, %v1274
        %v1276 = vpop.f32.mrf.mxu0
        %v1277 = vadd.f32 0.0, %v1276
        %1278 = vmatmul.bf16.gmra.mxu0 %v716
        %v1279 = vpop.f32.mrf.mxu0
        %v1280 = vadd.f32 0.0, %v1279
        %v1281 = vpop.f32.mrf.mxu0
        %v1282 = vadd.f32 0.0, %v1281
        %1283 = vmatmul.bf16.gmra.mxu0 %v719
        %v1284 = vpop.f32.mrf.mxu0
        %v1285 = vadd.f32 0.0, %v1284
        %v1286 = vpop.f32.mrf.mxu0
        %v1287 = vadd.f32 0.0, %v1286
        %1288 = vmatmul.bf16.gmra.mxu0 %v722
        %v1289 = vpop.f32.mrf.mxu0
        %v1290 = vadd.f32 0.0, %v1289
        %v1291 = vpop.f32.mrf.mxu0
        %v1292 = vadd.f32 0.0, %v1291
        %1293 = vmatmul.bf16.gmra.mxu0 %v725
        %v1294 = vpop.f32.mrf.mxu0
        %v1295 = vadd.f32 0.0, %v1294
        %v1296 = vpop.f32.mrf.mxu0
        %v1297 = vadd.f32 0.0, %v1296
        %1298 = vmatmul.bf16.gmra.mxu0 %v985
        %v1299 = vpop.f32.mrf.mxu0
        %v1300 = vadd.f32 0.0, %v1299
        %v1301 = vpop.f32.mrf.mxu0
        %v1302 = vadd.f32 0.0, %v1301
        %1303 = vmatmul.bf16.gmra.mxu0 %v1245
        %v1304 = vpop.f32.mrf.mxu0
        %v1305 = vadd.f32 0.0, %v1304
        %v1306 = vpop.f32.mrf.mxu0
        %v1307 = vadd.f32 0.0, %v1306
        %1308 = vdwg.mxu0
        %v1309 = vadd.f32 %v1222, %v1260
        %v1310 = vadd.f32 %v1223, %v1262
        %v1311 = vadd.f32 %v1224, %v1265
        %v1312 = vadd.f32 %v1225, %v1267
        %v1313 = vadd.f32 %v1226, %v1270
        %v1314 = vadd.f32 %v1227, %v1272
        %v1315 = vadd.f32 %v1228, %v1275
        %v1316 = vadd.f32 %v1229, %v1277
        %v1317 = vadd.f32 %v1230, %v1280
        %v1318 = vadd.f32 %v1231, %v1282
        %v1319 = vadd.f32 %v1232, %v1285
        %v1320 = vadd.f32 %v1233, %v1287
        %v1321 = vadd.f32 %v1234, %v1290
        %v1322 = vadd.f32 %v1235, %v1292
        %v1323 = vadd.f32 %v1236, %v1295
        %v1324 = vadd.f32 %v1237, %v1297
        %v1325 = vadd.f32 %v1238, %v1300
        %v1326 = vadd.f32 %v1239, %v1302
        %v1327 = vadd.f32 %v1240, %v1305
        %v1328 = vadd.f32 %v1241, %v1307
        %v1329 = vld [vmem:[%s2] sm:$0x1]
        %v1331 = vperm.slane %v1329, 0
        %v1333 = vmul.f32 %v1309, %v1331
        %v1334 = vmul.f32 %v1310, %v1331
        %v1335 = vmul.f32 %v1311, %v1331
        %v1336 = vmul.f32 %v1312, %v1331
        %v1337 = vmul.f32 %v1313, %v1331
        %v1338 = vmul.f32 %v1314, %v1331
        %v1339 = vmul.f32 %v1315, %v1331
        %v1340 = vmul.f32 %v1316, %v1331
        %v1341 = vmul.f32 %v1317, %v1331
        %v1342 = vmul.f32 %v1318, %v1331
        %v1343 = vmul.f32 %v1319, %v1331
        %v1344 = vmul.f32 %v1320, %v1331
        %v1345 = vmul.f32 %v1321, %v1331
        %v1346 = vmul.f32 %v1322, %v1331
        %v1347 = vmul.f32 %v1323, %v1331
        %v1348 = vmul.f32 %v1324, %v1331
        %v1349 = vmul.f32 %v1325, %v1331
        %v1350 = vmul.f32 %v1326, %v1331
        %v1351 = vmul.f32 %v1327, %v1331
        %v1352 = vmul.f32 %v1328, %v1331
        %v1353 = vld [vmem:[%s3] sm:$0x1]
        %v1355 = vperm.slane %v1353, 0
        %v1357 = vadd.f32 %v1333, %v1355
        %v1358 = vadd.f32 %v1334, %v1355
        %v1359 = vadd.f32 %v1335, %v1355
        %v1360 = vadd.f32 %v1336, %v1355
        %v1361 = vadd.f32 %v1337, %v1355
        %v1362 = vadd.f32 %v1338, %v1355
        %v1363 = vadd.f32 %v1339, %v1355
        %v1364 = vadd.f32 %v1340, %v1355
        %v1365 = vadd.f32 %v1341, %v1355
        %v1366 = vadd.f32 %v1342, %v1355
        %v1367 = vadd.f32 %v1343, %v1355
        %v1368 = vadd.f32 %v1344, %v1355
        %v1369 = vadd.f32 %v1345, %v1355
        %v1370 = vadd.f32 %v1346, %v1355
        %v1371 = vadd.f32 %v1347, %v1355
        %v1372 = vadd.f32 %v1348, %v1355
        %v1373 = vadd.f32 %v1349, %v1355
        %v1374 = vadd.f32 %v1350, %v1355
        %v1375 = vadd.f32 %v1351, %v1355
        %v1376 = vadd.f32 %v1352, %v1355
        %v1377 = vmax.f32 %v1357, 0.0
        %v1378 = vmax.f32 %v1358, 0.0
        %v1379 = vmax.f32 %v1359, 0.0
        %v1380 = vmax.f32 %v1360, 0.0
        %v1381 = vmax.f32 %v1361, 0.0
        %v1382 = vmax.f32 %v1362, 0.0
        %v1383 = vmax.f32 %v1363, 0.0
        %v1384 = vmax.f32 %v1364, 0.0
        %v1385 = vmax.f32 %v1365, 0.0
        %v1386 = vmax.f32 %v1366, 0.0
        %v1387 = vmax.f32 %v1367, 0.0
        %v1388 = vmax.f32 %v1368, 0.0
        %v1389 = vmax.f32 %v1369, 0.0
        %v1390 = vmax.f32 %v1370, 0.0
        %v1391 = vmax.f32 %v1371, 0.0
        %v1392 = vmax.f32 %v1372, 0.0
        %v1393 = vmax.f32 %v1373, 0.0
        %v1394 = vmax.f32 %v1374, 0.0
        %v1395 = vmax.f32 %v1375, 0.0
        %v1396 = vmax.f32 %v1376, 0.0
        %v1397 = vpack.c.bf16 %v1377, %v1377
        %v1398 = vpack.c.bf16 %v1378, %v1378
        %v1399 = vpack.c.bf16 %v1379, %v1379
        %v1400 = vpack.c.bf16 %v1380, %v1380
        %v1401 = vpack.c.bf16 %v1381, %v1381
        %v1402 = vpack.c.bf16 %v1382, %v1382
        %v1403 = vpack.c.bf16 %v1383, %v1383
        %v1404 = vpack.c.bf16 %v1384, %v1384
        %v1405 = vpack.c.bf16 %v1385, %v1385
        %v1406 = vpack.c.bf16 %v1386, %v1386
        %v1407 = vpack.c.bf16 %v1387, %v1387
        %v1408 = vpack.c.bf16 %v1388, %v1388
        %v1409 = vpack.c.bf16 %v1389, %v1389
        %v1410 = vpack.c.bf16 %v1390, %v1390
        %v1411 = vpack.c.bf16 %v1391, %v1391
        %v1412 = vpack.c.bf16 %v1392, %v1392
        %v1413 = vpack.c.bf16 %v1393, %v1393
        %v1414 = vpack.c.bf16 %v1394, %v1394
        %v1415 = vpack.c.bf16 %v1395, %v1395
        %v1416 = vpack.c.bf16 %v1396, %v1396
        %vm1417 = vcmask 257024
        %1418 = vst.msk [vmem:[#allocation2] sm:$0xf] %vm1417, %v1397
        %1419 = vst.msk [vmem:[#allocation2 + $0x4] sm:$0xf] %vm1417, %v1398
        %1420 = vst.msk [vmem:[#allocation2 + $0x8] sm:$0xf] %vm1417, %v1399
        %1421 = vst.msk [vmem:[#allocation2 + $0xc] sm:$0xf] %vm1417, %v1400
        %1422 = vst.msk [vmem:[#allocation2 + $0x10] sm:$0xf] %vm1417, %v1401
        %1423 = vst.msk [vmem:[#allocation2 + $0x14] sm:$0xf] %vm1417, %v1402
        %1424 = vst.msk [vmem:[#allocation2 + $0x18] sm:$0xf] %vm1417, %v1403
        %1425 = vst.msk [vmem:[#allocation2 + $0x1c] sm:$0xf] %vm1417, %v1404
        %1426 = vst.msk [vmem:[#allocation2 + $0x20] sm:$0xf] %vm1417, %v1405
        %1427 = vst.msk [vmem:[#allocation2 + $0x24] sm:$0xf] %vm1417, %v1406
        %1428 = vst.msk [vmem:[#allocation2 + $0x28] sm:$0xf] %vm1417, %v1407
        %1429 = vst.msk [vmem:[#allocation2 + $0x2c] sm:$0xf] %vm1417, %v1408
        %1430 = vst.msk [vmem:[#allocation2 + $0x30] sm:$0xf] %vm1417, %v1409
        %1431 = vst.msk [vmem:[#allocation2 + $0x34] sm:$0xf] %vm1417, %v1410
        %1432 = vst.msk [vmem:[#allocation2 + $0x38] sm:$0xf] %vm1417, %v1411
        %1433 = vst.msk [vmem:[#allocation2 + $0x3c] sm:$0xf] %vm1417, %v1412
        %1434 = vst.msk [vmem:[#allocation2 + $0x40] sm:$0xf] %vm1417, %v1413
        %1435 = vst.msk [vmem:[#allocation2 + $0x44] sm:$0xf] %vm1417, %v1414
        %1436 = vst.msk [vmem:[#allocation2 + $0x48] sm:$0xf] %vm1417, %v1415
        %1437 = vst.msk [vmem:[#allocation2 + $0x4c] sm:$0xf] %vm1417, %v1416
        %p1438 = scmp.eq.s32.totalorder %s25, 0
        // Predicated region
        $region45: #{tpu_custom_call.1} parent=43 // pred_check
          %p1439 = pneg %p1438
        $region46: #{tpu_custom_call.1} parent=43 // pred_check_branch
          %1441 = sbr.rel (%p1439) target = $region48
        $region47: #{tpu_custom_call.1} parent=43 // pred_region
          %1442 = vst.msk [vmem:[#allocation2] sm:$0xf] %vm1417, 0
          %1443 = vst.msk [vmem:[#allocation2 + $0x4] sm:$0xf] %vm1417, 0
        $region48: #{tpu_custom_call.1} parent=43 // pred_fallthru
          _
        %p1444 = scmp.eq.s32.totalorder %s25, 1
        // Predicated region
        $region49: #{tpu_custom_call.1} parent=43 // pred_check
          %p1445 = pneg %p1444
        $region50: #{tpu_custom_call.1} parent=43 // pred_check_branch
          %1447 = sbr.rel (%p1445) target = $region52
        $region51: #{tpu_custom_call.1} parent=43 // pred_region
          %s1448 = scalar_lea.vmem [#allocation2], 72
          %1449 = vst.msk [vmem:[%s1448] sm:$0xf] %vm1417, 0
          %1450 = vst.msk [vmem:[%s1448 + $0x4] sm:$0xf] %vm1417, 0
        $region52: #{tpu_custom_call.1} parent=43 // pred_fallthru
          _
        %v1451 = vld [vmem:[#allocation2] sm:$0xf]
        %v1452 = vld [vmem:[#allocation2 + $0x4] sm:$0xf]
        %v1453 = vld [vmem:[#allocation2 + $0x8] sm:$0xf]
        %v1454 = vld [vmem:[#allocation2 + $0xc] sm:$0xf]
        %v1455 = vld [vmem:[#allocation2 + $0x10] sm:$0xf]
        %v1456 = vld [vmem:[#allocation2 + $0x14] sm:$0xf]
        %v1457 = vld [vmem:[#allocation2 + $0x18] sm:$0xf]
        %v1458 = vld [vmem:[#allocation2 + $0x1c] sm:$0xf]
        %v1459 = vld [vmem:[#allocation2 + $0x20] sm:$0xf]
        %v1460 = vld [vmem:[#allocation2 + $0x24] sm:$0xf]
        %v1461 = vld [vmem:[#allocation2 + $0x28] sm:$0xf]
        %v1462 = vld [vmem:[#allocation2 + $0x2c] sm:$0xf]
        %v1463 = vld [vmem:[#allocation2 + $0x30] sm:$0xf]
        %v1464 = vld [vmem:[#allocation2 + $0x34] sm:$0xf]
        %v1465 = vld [vmem:[#allocation2 + $0x38] sm:$0xf]
        %v1466 = vld [vmem:[#allocation2 + $0x3c] sm:$0xf]
        %v1483 = vunpack.c.l.b16 %v1451
        %v1484 = vunpack.c.l.b16 %v1452
        %v1485 = vunpack.c.l.b16 %v1453
        %v1486 = vunpack.c.l.b16 %v1454
        %v1487 = vunpack.c.l.b16 %v1455
        %v1488 = vunpack.c.l.b16 %v1456
        %v1489 = vunpack.c.l.b16 %v1457
        %v1490 = vunpack.c.l.b16 %v1458
        %v1491 = vunpack.c.l.b16 %v1459
        %v1492 = vunpack.c.l.b16 %v1460
        %v1493 = vunpack.c.l.b16 %v1461
        %v1494 = vunpack.c.l.b16 %v1462
        %v1495 = vunpack.c.l.b16 %v1463
        %v1496 = vunpack.c.l.b16 %v1464
        %v1497 = vunpack.c.l.b16 %v1465
        %v1498 = vunpack.c.l.b16 %v1466
        %v1499 = vpack.c.b16 %v1484, %v1483
        %v1500 = vpack.c.b16 %v1486, %v1485
        %v1501 = vpack.c.b16 %v1488, %v1487
        %v1502 = vpack.c.b16 %v1490, %v1489
        %v1503 = vpack.c.b16 %v1492, %v1491
        %v1504 = vpack.c.b16 %v1494, %v1493
        %v1505 = vpack.c.b16 %v1496, %v1495
        %v1506 = vpack.c.b16 %v1498, %v1497
        %v1508 = vshrl.u32 %v1499, 16
        %v1510 = vrot.slane %v1508, 7
        %v1511 = vshll.u32 %v1499, 16
        %v1513 = vor.u32 %v1510, %v1511
        %v1515 = vshrl.u32 %v1500, 16
        %v1517 = vrot.slane %v1515, 7
        %v1518 = vshll.u32 %v1500, 16
        %v1520 = vor.u32 %v1517, %v1518
        %v1522 = vshrl.u32 %v1501, 16
        %v1524 = vrot.slane %v1522, 7
        %v1525 = vshll.u32 %v1501, 16
        %v1527 = vor.u32 %v1524, %v1525
        %v1529 = vshrl.u32 %v1502, 16
        %v1531 = vrot.slane %v1529, 7
        %v1532 = vshll.u32 %v1502, 16
        %v1534 = vor.u32 %v1531, %v1532
        %v1536 = vshrl.u32 %v1503, 16
        %v1538 = vrot.slane %v1536, 7
        %v1539 = vshll.u32 %v1503, 16
        %v1541 = vor.u32 %v1538, %v1539
        %v1543 = vshrl.u32 %v1504, 16
        %v1545 = vrot.slane %v1543, 7
        %v1546 = vshll.u32 %v1504, 16
        %v1548 = vor.u32 %v1545, %v1546
        %v1550 = vshrl.u32 %v1505, 16
        %v1552 = vrot.slane %v1550, 7
        %v1553 = vshll.u32 %v1505, 16
        %v1555 = vor.u32 %v1552, %v1553
        %v1557 = vshrl.u32 %v1506, 16
        %v1559 = vrot.slane %v1557, 7
        %v1560 = vshll.u32 %v1506, 16
        %v1562 = vor.u32 %v1559, %v1560
        %v1571 = vsel %vm452, 0, %v1513
        %v1572 = vsel %vm452, 0, %v1520
        %v1573 = vsel %vm452, 0, %v1527
        %v1574 = vsel %vm452, 0, %v1534
        %v1575 = vsel %vm452, 0, %v1541
        %v1576 = vsel %vm452, 0, %v1548
        %v1577 = vsel %vm452, 0, %v1555
        %v1578 = vsel %vm452, 0, %v1562
        %v1579 = vld [vmem:[%s4] sm:$0xf]
        %v1580 = vld [vmem:[%s4 + $0x4] sm:$0xf]
        %v1581 = vld [vmem:[%s4 + $0x8] sm:$0xf]
        %v1582 = vld [vmem:[%s4 + $0xc] sm:$0xf]
        %s1583 = scalar_lea.vmem %s4, 16
        %v1584 = vld [vmem:[%s1583] sm:$0xf]
        %v1585 = vld [vmem:[%s1583 + $0x4] sm:$0xf]
        %v1586 = vld [vmem:[%s1583 + $0x8] sm:$0xf]
        %v1587 = vld [vmem:[%s1583 + $0xc] sm:$0xf]
        %v1592 = vunpack.c.l.b16 %v1584
        %v1593 = vunpack.c.l.b16 %v1585
        %v1594 = vunpack.c.l.b16 %v1586
        %v1595 = vunpack.c.l.b16 %v1587
        %v1596 = vpack.c.b16 %v1593, %v1592
        %v1597 = vpack.c.b16 %v1595, %v1594
        %vm1600 = vcmask 261120
        %v1601 = vsel %vm1600, %v1499, 0
        %v1603 = vsel %vm1600, %v1500, 0
        %v1605 = vsel %vm1600, %v1501, 0
        %v1607 = vsel %vm1600, %v1502, 0
        %v1609 = vsel %vm1600, %v1503, 0
        %v1611 = vsel %vm1600, %v1504, 0
        %v1613 = vsel %vm1600, %v1505, 0
        %v1615 = vsel %vm1600, %v1506, 0
        %1617 = vmatpush.bf16.msra.mxu0 0
        %1618 = vmatpush.bf16.msra.mxu0 0
        %1619 = vmatpush.bf16.msra.mxu0 0
        %1620 = vmatpush.bf16.msra.mxu0 0
        %1621 = vmatpush.bf16.msra.mxu0 0
        %1622 = vmatpush.bf16.msra.mxu0 0
        %1623 = vmatpush.bf16.msra.mxu0 %v1597
        %1624 = vmatpush.bf16.msra.mxu0 %v1596
        %1625 = vmatmul.bf16.gmra.mxu0 %v1601
        %v1626 = vpop.f32.mrf.mxu0
        %v1627 = vadd.f32 0.0, %v1626
        %v1628 = vpop.f32.mrf.mxu0
        %v1629 = vadd.f32 0.0, %v1628
        %1630 = vmatmul.bf16.gmra.mxu0 %v1603
        %v1631 = vpop.f32.mrf.mxu0
        %v1632 = vadd.f32 0.0, %v1631
        %v1633 = vpop.f32.mrf.mxu0
        %v1634 = vadd.f32 0.0, %v1633
        %1635 = vmatmul.bf16.gmra.mxu0 %v1605
        %v1636 = vpop.f32.mrf.mxu0
        %v1637 = vadd.f32 0.0, %v1636
        %v1638 = vpop.f32.mrf.mxu0
        %v1639 = vadd.f32 0.0, %v1638
        %1640 = vmatmul.bf16.gmra.mxu0 %v1607
        %v1641 = vpop.f32.mrf.mxu0
        %v1642 = vadd.f32 0.0, %v1641
        %v1643 = vpop.f32.mrf.mxu0
        %v1644 = vadd.f32 0.0, %v1643
        %1645 = vmatmul.bf16.gmra.mxu0 %v1609
        %v1646 = vpop.f32.mrf.mxu0
        %v1647 = vadd.f32 0.0, %v1646
        %v1648 = vpop.f32.mrf.mxu0
        %v1649 = vadd.f32 0.0, %v1648
        %1650 = vmatmul.bf16.gmra.mxu0 %v1611
        %v1651 = vpop.f32.mrf.mxu0
        %v1652 = vadd.f32 0.0, %v1651
        %v1653 = vpop.f32.mrf.mxu0
        %v1654 = vadd.f32 0.0, %v1653
        %1655 = vmatmul.bf16.gmra.mxu0 %v1613
        %v1656 = vpop.f32.mrf.mxu0
        %v1657 = vadd.f32 0.0, %v1656
        %v1658 = vpop.f32.mrf.mxu0
        %v1659 = vadd.f32 0.0, %v1658
        %1660 = vmatmul.bf16.gmra.mxu0 %v1615
        %v1661 = vpop.f32.mrf.mxu0
        %v1662 = vadd.f32 0.0, %v1661
        %v1663 = vpop.f32.mrf.mxu0
        %v1664 = vadd.f32 0.0, %v1663
        %1665 = vdwg.mxu0
        %v1670 = vunpack.c.l.b16 %v1579
        %v1671 = vunpack.c.l.b16 %v1580
        %v1672 = vunpack.c.l.b16 %v1581
        %v1673 = vunpack.c.l.b16 %v1582
        %v1674 = vpack.c.b16 %v1671, %v1670
        %v1675 = vpack.c.b16 %v1673, %v1672
        %v1679 = vsel %vm1600, %v1571, 0
        %v1682 = vsel %vm1600, %v1572, 0
        %v1685 = vsel %vm1600, %v1573, 0
        %v1688 = vsel %vm1600, %v1574, 0
        %v1691 = vsel %vm1600, %v1575, 0
        %v1694 = vsel %vm1600, %v1576, 0
        %v1697 = vsel %vm1600, %v1577, 0
        %v1700 = vsel %vm1600, %v1578, 0
        %1702 = vmatpush.bf16.msra.mxu0 0
        %1703 = vmatpush.bf16.msra.mxu0 0
        %1704 = vmatpush.bf16.msra.mxu0 0
        %1705 = vmatpush.bf16.msra.mxu0 0
        %1706 = vmatpush.bf16.msra.mxu0 0
        %1707 = vmatpush.bf16.msra.mxu0 0
        %1708 = vmatpush.bf16.msra.mxu0 %v1675
        %1709 = vmatpush.bf16.msra.mxu0 %v1674
        %1710 = vmatmul.bf16.gmra.mxu0 %v1679
        %v1711 = vpop.f32.mrf.mxu0
        %v1712 = vadd.f32 %v1627, %v1711
        %v1713 = vpop.f32.mrf.mxu0
        %v1714 = vadd.f32 %v1629, %v1713
        %1715 = vmatmul.bf16.gmra.mxu0 %v1682
        %v1716 = vpop.f32.mrf.mxu0
        %v1717 = vadd.f32 %v1632, %v1716
        %v1718 = vpop.f32.mrf.mxu0
        %v1719 = vadd.f32 %v1634, %v1718
        %1720 = vmatmul.bf16.gmra.mxu0 %v1685
        %v1721 = vpop.f32.mrf.mxu0
        %v1722 = vadd.f32 %v1637, %v1721
        %v1723 = vpop.f32.mrf.mxu0
        %v1724 = vadd.f32 %v1639, %v1723
        %1725 = vmatmul.bf16.gmra.mxu0 %v1688
        %v1726 = vpop.f32.mrf.mxu0
        %v1727 = vadd.f32 %v1642, %v1726
        %v1728 = vpop.f32.mrf.mxu0
        %v1729 = vadd.f32 %v1644, %v1728
        %1730 = vmatmul.bf16.gmra.mxu0 %v1691
        %v1731 = vpop.f32.mrf.mxu0
        %v1732 = vadd.f32 %v1647, %v1731
        %v1733 = vpop.f32.mrf.mxu0
        %v1734 = vadd.f32 %v1649, %v1733
        %1735 = vmatmul.bf16.gmra.mxu0 %v1694
        %v1736 = vpop.f32.mrf.mxu0
        %v1737 = vadd.f32 %v1652, %v1736
        %v1738 = vpop.f32.mrf.mxu0
        %v1739 = vadd.f32 %v1654, %v1738
        %1740 = vmatmul.bf16.gmra.mxu0 %v1697
        %v1741 = vpop.f32.mrf.mxu0
        %v1742 = vadd.f32 %v1657, %v1741
        %v1743 = vpop.f32.mrf.mxu0
        %v1744 = vadd.f32 %v1659, %v1743
        %1745 = vmatmul.bf16.gmra.mxu0 %v1700
        %v1746 = vpop.f32.mrf.mxu0
        %v1747 = vadd.f32 %v1662, %v1746
        %v1748 = vpop.f32.mrf.mxu0
        %v1749 = vadd.f32 %v1664, %v1748
        %1750 = vdwg.mxu0
        %v1751 = vrot.slane %v1511, 1
        %v1752 = vor.u32 %v1508, %v1751
        %v1753 = vrot.slane %v1518, 1
        %v1754 = vor.u32 %v1515, %v1753
        %v1755 = vrot.slane %v1525, 1
        %v1756 = vor.u32 %v1522, %v1755
        %v1757 = vrot.slane %v1532, 1
        %v1758 = vor.u32 %v1529, %v1757
        %v1759 = vrot.slane %v1539, 1
        %v1760 = vor.u32 %v1536, %v1759
        %v1761 = vrot.slane %v1546, 1
        %v1762 = vor.u32 %v1543, %v1761
        %v1763 = vrot.slane %v1553, 1
        %v1764 = vor.u32 %v1550, %v1763
        %v1765 = vrot.slane %v1560, 1
        %v1766 = vor.u32 %v1557, %v1765
        %v1775 = vsel %vm503, %v1752, 0
        %v1776 = vsel %vm503, %v1754, 0
        %v1777 = vsel %vm503, %v1756, 0
        %v1778 = vsel %vm503, %v1758, 0
        %v1779 = vsel %vm503, %v1760, 0
        %v1780 = vsel %vm503, %v1762, 0
        %v1781 = vsel %vm503, %v1764, 0
        %v1782 = vsel %vm503, %v1766, 0
        %s1783 = scalar_lea.vmem %s4, 32
        %v1784 = vld [vmem:[%s1783] sm:$0xf]
        %v1785 = vld [vmem:[%s1783 + $0x4] sm:$0xf]
        %v1786 = vld [vmem:[%s1783 + $0x8] sm:$0xf]
        %v1787 = vld [vmem:[%s1783 + $0xc] sm:$0xf]
        %v1792 = vunpack.c.l.b16 %v1784
        %v1793 = vunpack.c.l.b16 %v1785
        %v1794 = vunpack.c.l.b16 %v1786
        %v1795 = vunpack.c.l.b16 %v1787
        %v1796 = vpack.c.b16 %v1793, %v1792
        %v1797 = vpack.c.b16 %v1795, %v1794
        %v1801 = vsel %vm1600, %v1775, 0
        %v1804 = vsel %vm1600, %v1776, 0
        %v1807 = vsel %vm1600, %v1777, 0
        %v1810 = vsel %vm1600, %v1778, 0
        %v1813 = vsel %vm1600, %v1779, 0
        %v1816 = vsel %vm1600, %v1780, 0
        %v1819 = vsel %vm1600, %v1781, 0
        %v1822 = vsel %vm1600, %v1782, 0
        %1824 = vmatpush.bf16.msra.mxu0 0
        %1825 = vmatpush.bf16.msra.mxu0 0
        %1826 = vmatpush.bf16.msra.mxu0 0
        %1827 = vmatpush.bf16.msra.mxu0 0
        %1828 = vmatpush.bf16.msra.mxu0 0
        %1829 = vmatpush.bf16.msra.mxu0 0
        %1830 = vmatpush.bf16.msra.mxu0 %v1797
        %1831 = vmatpush.bf16.msra.mxu0 %v1796
        %1832 = vmatmul.bf16.gmra.mxu0 %v1801
        %v1833 = vpop.f32.mrf.mxu0
        %v1834 = vadd.f32 0.0, %v1833
        %v1835 = vpop.f32.mrf.mxu0
        %v1836 = vadd.f32 0.0, %v1835
        %1837 = vmatmul.bf16.gmra.mxu0 %v1804
        %v1838 = vpop.f32.mrf.mxu0
        %v1839 = vadd.f32 0.0, %v1838
        %v1840 = vpop.f32.mrf.mxu0
        %v1841 = vadd.f32 0.0, %v1840
        %1842 = vmatmul.bf16.gmra.mxu0 %v1807
        %v1843 = vpop.f32.mrf.mxu0
        %v1844 = vadd.f32 0.0, %v1843
        %v1845 = vpop.f32.mrf.mxu0
        %v1846 = vadd.f32 0.0, %v1845
        %1847 = vmatmul.bf16.gmra.mxu0 %v1810
        %v1848 = vpop.f32.mrf.mxu0
        %v1849 = vadd.f32 0.0, %v1848
        %v1850 = vpop.f32.mrf.mxu0
        %v1851 = vadd.f32 0.0, %v1850
        %1852 = vmatmul.bf16.gmra.mxu0 %v1813
        %v1853 = vpop.f32.mrf.mxu0
        %v1854 = vadd.f32 0.0, %v1853
        %v1855 = vpop.f32.mrf.mxu0
        %v1856 = vadd.f32 0.0, %v1855
        %1857 = vmatmul.bf16.gmra.mxu0 %v1816
        %v1858 = vpop.f32.mrf.mxu0
        %v1859 = vadd.f32 0.0, %v1858
        %v1860 = vpop.f32.mrf.mxu0
        %v1861 = vadd.f32 0.0, %v1860
        %1862 = vmatmul.bf16.gmra.mxu0 %v1819
        %v1863 = vpop.f32.mrf.mxu0
        %v1864 = vadd.f32 0.0, %v1863
        %v1865 = vpop.f32.mrf.mxu0
        %v1866 = vadd.f32 0.0, %v1865
        %1867 = vmatmul.bf16.gmra.mxu0 %v1822
        %v1868 = vpop.f32.mrf.mxu0
        %v1869 = vadd.f32 0.0, %v1868
        %v1870 = vpop.f32.mrf.mxu0
        %v1871 = vadd.f32 0.0, %v1870
        %1872 = vdwg.mxu0
        %v1873 = vadd.f32 %v1712, %v1834
        %v1874 = vadd.f32 %v1714, %v1836
        %v1875 = vadd.f32 %v1717, %v1839
        %v1876 = vadd.f32 %v1719, %v1841
        %v1877 = vadd.f32 %v1722, %v1844
        %v1878 = vadd.f32 %v1724, %v1846
        %v1879 = vadd.f32 %v1727, %v1849
        %v1880 = vadd.f32 %v1729, %v1851
        %v1881 = vadd.f32 %v1732, %v1854
        %v1882 = vadd.f32 %v1734, %v1856
        %v1883 = vadd.f32 %v1737, %v1859
        %v1884 = vadd.f32 %v1739, %v1861
        %v1885 = vadd.f32 %v1742, %v1864
        %v1886 = vadd.f32 %v1744, %v1866
        %v1887 = vadd.f32 %v1747, %v1869
        %v1888 = vadd.f32 %v1749, %v1871
        %s1889 = scalar_lea.vmem [#allocation2], 8
        %v1890 = vld [vmem:[%s1889] sm:$0xf]
        %v1891 = vld [vmem:[%s1889 + $0x4] sm:$0xf]
        %v1892 = vld [vmem:[%s1889 + $0x8] sm:$0xf]
        %v1893 = vld [vmem:[%s1889 + $0xc] sm:$0xf]
        %v1894 = vld [vmem:[%s1889 + $0x10] sm:$0xf]
        %v1895 = vld [vmem:[%s1889 + $0x14] sm:$0xf]
        %v1896 = vld [vmem:[%s1889 + $0x18] sm:$0xf]
        %v1897 = vld [vmem:[%s1889 + $0x1c] sm:$0xf]
        %v1898 = vld [vmem:[%s1889 + $0x20] sm:$0xf]
        %v1899 = vld [vmem:[%s1889 + $0x24] sm:$0xf]
        %v1900 = vld [vmem:[%s1889 + $0x28] sm:$0xf]
        %v1901 = vld [vmem:[%s1889 + $0x2c] sm:$0xf]
        %v1902 = vld [vmem:[%s1889 + $0x30] sm:$0xf]
        %v1903 = vld [vmem:[%s1889 + $0x34] sm:$0xf]
        %v1904 = vld [vmem:[%s1889 + $0x38] sm:$0xf]
        %v1905 = vld [vmem:[%s1889 + $0x3c] sm:$0xf]
        %v1922 = vunpack.c.l.b16 %v1890
        %v1923 = vunpack.c.l.b16 %v1891
        %v1924 = vunpack.c.l.b16 %v1892
        %v1925 = vunpack.c.l.b16 %v1893
        %v1926 = vunpack.c.l.b16 %v1894
        %v1927 = vunpack.c.l.b16 %v1895
        %v1928 = vunpack.c.l.b16 %v1896
        %v1929 = vunpack.c.l.b16 %v1897
        %v1930 = vunpack.c.l.b16 %v1898
        %v1931 = vunpack.c.l.b16 %v1899
        %v1932 = vunpack.c.l.b16 %v1900
        %v1933 = vunpack.c.l.b16 %v1901
        %v1934 = vunpack.c.l.b16 %v1902
        %v1935 = vunpack.c.l.b16 %v1903
        %v1936 = vunpack.c.l.b16 %v1904
        %v1937 = vunpack.c.l.b16 %v1905
        %v1938 = vpack.c.b16 %v1923, %v1922
        %v1939 = vpack.c.b16 %v1925, %v1924
        %v1940 = vpack.c.b16 %v1927, %v1926
        %v1941 = vpack.c.b16 %v1929, %v1928
        %v1942 = vpack.c.b16 %v1931, %v1930
        %v1943 = vpack.c.b16 %v1933, %v1932
        %v1944 = vpack.c.b16 %v1935, %v1934
        %v1945 = vpack.c.b16 %v1937, %v1936
        %v1947 = vshrl.u32 %v1938, 16
        %v1949 = vrot.slane %v1947, 7
        %v1950 = vshll.u32 %v1938, 16
        %v1952 = vor.u32 %v1949, %v1950
        %v1954 = vshrl.u32 %v1939, 16
        %v1956 = vrot.slane %v1954, 7
        %v1957 = vshll.u32 %v1939, 16
        %v1959 = vor.u32 %v1956, %v1957
        %v1961 = vshrl.u32 %v1940, 16
        %v1963 = vrot.slane %v1961, 7
        %v1964 = vshll.u32 %v1940, 16
        %v1966 = vor.u32 %v1963, %v1964
        %v1968 = vshrl.u32 %v1941, 16
        %v1970 = vrot.slane %v1968, 7
        %v1971 = vshll.u32 %v1941, 16
        %v1973 = vor.u32 %v1970, %v1971
        %v1975 = vshrl.u32 %v1942, 16
        %v1977 = vrot.slane %v1975, 7
        %v1978 = vshll.u32 %v1942, 16
        %v1980 = vor.u32 %v1977, %v1978
        %v1982 = vshrl.u32 %v1943, 16
        %v1984 = vrot.slane %v1982, 7
        %v1985 = vshll.u32 %v1943, 16
        %v1987 = vor.u32 %v1984, %v1985
        %v1989 = vshrl.u32 %v1944, 16
        %v1991 = vrot.slane %v1989, 7
        %v1992 = vshll.u32 %v1944, 16
        %v1994 = vor.u32 %v1991, %v1992
        %v1996 = vshrl.u32 %v1945, 16
        %v1998 = vrot.slane %v1996, 7
        %v1999 = vshll.u32 %v1945, 16
        %v2001 = vor.u32 %v1998, %v1999
        %v2010 = vsel %vm452, 0, %v1952
        %v2011 = vsel %vm452, 0, %v1959
        %v2012 = vsel %vm452, 0, %v1966
        %v2013 = vsel %vm452, 0, %v1973
        %v2014 = vsel %vm452, 0, %v1980
        %v2015 = vsel %vm452, 0, %v1987
        %v2016 = vsel %vm452, 0, %v1994
        %v2017 = vsel %vm452, 0, %v2001
        %s2018 = scalar_lea.vmem %s4, 48
        %v2019 = vld [vmem:[%s2018] sm:$0xf]
        %v2020 = vld [vmem:[%s2018 + $0x4] sm:$0xf]
        %v2021 = vld [vmem:[%s2018 + $0x8] sm:$0xf]
        %v2022 = vld [vmem:[%s2018 + $0xc] sm:$0xf]
        %v2027 = vunpack.c.l.b16 %v2019
        %v2028 = vunpack.c.l.b16 %v2020
        %v2029 = vunpack.c.l.b16 %v2021
        %v2030 = vunpack.c.l.b16 %v2022
        %v2031 = vpack.c.b16 %v2028, %v2027
        %v2032 = vpack.c.b16 %v2030, %v2029
        %v2036 = vsel %vm1600, %v2010, 0
        %v2039 = vsel %vm1600, %v2011, 0
        %v2042 = vsel %vm1600, %v2012, 0
        %v2045 = vsel %vm1600, %v2013, 0
        %v2048 = vsel %vm1600, %v2014, 0
        %v2051 = vsel %vm1600, %v2015, 0
        %v2054 = vsel %vm1600, %v2016, 0
        %v2057 = vsel %vm1600, %v2017, 0
        %2059 = vmatpush.bf16.msra.mxu0 0
        %2060 = vmatpush.bf16.msra.mxu0 0
        %2061 = vmatpush.bf16.msra.mxu0 0
        %2062 = vmatpush.bf16.msra.mxu0 0
        %2063 = vmatpush.bf16.msra.mxu0 0
        %2064 = vmatpush.bf16.msra.mxu0 0
        %2065 = vmatpush.bf16.msra.mxu0 %v2032
        %2066 = vmatpush.bf16.msra.mxu0 %v2031
        %2067 = vmatmul.bf16.gmra.mxu0 %v2036
        %v2068 = vpop.f32.mrf.mxu0
        %v2069 = vadd.f32 0.0, %v2068
        %v2070 = vpop.f32.mrf.mxu0
        %v2071 = vadd.f32 0.0, %v2070
        %2072 = vmatmul.bf16.gmra.mxu0 %v2039
        %v2073 = vpop.f32.mrf.mxu0
        %v2074 = vadd.f32 0.0, %v2073
        %v2075 = vpop.f32.mrf.mxu0
        %v2076 = vadd.f32 0.0, %v2075
        %2077 = vmatmul.bf16.gmra.mxu0 %v2042
        %v2078 = vpop.f32.mrf.mxu0
        %v2079 = vadd.f32 0.0, %v2078
        %v2080 = vpop.f32.mrf.mxu0
        %v2081 = vadd.f32 0.0, %v2080
        %2082 = vmatmul.bf16.gmra.mxu0 %v2045
        %v2083 = vpop.f32.mrf.mxu0
        %v2084 = vadd.f32 0.0, %v2083
        %v2085 = vpop.f32.mrf.mxu0
        %v2086 = vadd.f32 0.0, %v2085
        %2087 = vmatmul.bf16.gmra.mxu0 %v2048
        %v2088 = vpop.f32.mrf.mxu0
        %v2089 = vadd.f32 0.0, %v2088
        %v2090 = vpop.f32.mrf.mxu0
        %v2091 = vadd.f32 0.0, %v2090
        %2092 = vmatmul.bf16.gmra.mxu0 %v2051
        %v2093 = vpop.f32.mrf.mxu0
        %v2094 = vadd.f32 0.0, %v2093
        %v2095 = vpop.f32.mrf.mxu0
        %v2096 = vadd.f32 0.0, %v2095
        %2097 = vmatmul.bf16.gmra.mxu0 %v2054
        %v2098 = vpop.f32.mrf.mxu0
        %v2099 = vadd.f32 0.0, %v2098
        %v2100 = vpop.f32.mrf.mxu0
        %v2101 = vadd.f32 0.0, %v2100
        %2102 = vmatmul.bf16.gmra.mxu0 %v2057
        %v2103 = vpop.f32.mrf.mxu0
        %v2104 = vadd.f32 0.0, %v2103
        %v2105 = vpop.f32.mrf.mxu0
        %v2106 = vadd.f32 0.0, %v2105
        %2107 = vdwg.mxu0
        %v2108 = vadd.f32 %v1873, %v2069
        %v2109 = vadd.f32 %v1874, %v2071
        %v2110 = vadd.f32 %v1875, %v2074
        %v2111 = vadd.f32 %v1876, %v2076
        %v2112 = vadd.f32 %v1877, %v2079
        %v2113 = vadd.f32 %v1878, %v2081
        %v2114 = vadd.f32 %v1879, %v2084
        %v2115 = vadd.f32 %v1880, %v2086
        %v2116 = vadd.f32 %v1881, %v2089
        %v2117 = vadd.f32 %v1882, %v2091
        %v2118 = vadd.f32 %v1883, %v2094
        %v2119 = vadd.f32 %v1884, %v2096
        %v2120 = vadd.f32 %v1885, %v2099
        %v2121 = vadd.f32 %v1886, %v2101
        %v2122 = vadd.f32 %v1887, %v2104
        %v2123 = vadd.f32 %v1888, %v2106
        %s2124 = scalar_lea.vmem %s4, 64
        %v2125 = vld [vmem:[%s2124] sm:$0xf]
        %v2126 = vld [vmem:[%s2124 + $0x4] sm:$0xf]
        %v2127 = vld [vmem:[%s2124 + $0x8] sm:$0xf]
        %v2128 = vld [vmem:[%s2124 + $0xc] sm:$0xf]
        %v2133 = vunpack.c.l.b16 %v2125
        %v2134 = vunpack.c.l.b16 %v2126
        %v2135 = vunpack.c.l.b16 %v2127
        %v2136 = vunpack.c.l.b16 %v2128
        %v2137 = vpack.c.b16 %v2134, %v2133
        %v2138 = vpack.c.b16 %v2136, %v2135
        %v2141 = vsel %vm1600, %v1938, 0
        %v2143 = vsel %vm1600, %v1939, 0
        %v2145 = vsel %vm1600, %v1940, 0
        %v2147 = vsel %vm1600, %v1941, 0
        %v2149 = vsel %vm1600, %v1942, 0
        %v2151 = vsel %vm1600, %v1943, 0
        %v2153 = vsel %vm1600, %v1944, 0
        %v2155 = vsel %vm1600, %v1945, 0
        %2157 = vmatpush.bf16.msra.mxu0 0
        %2158 = vmatpush.bf16.msra.mxu0 0
        %2159 = vmatpush.bf16.msra.mxu0 0
        %2160 = vmatpush.bf16.msra.mxu0 0
        %2161 = vmatpush.bf16.msra.mxu0 0
        %2162 = vmatpush.bf16.msra.mxu0 0
        %2163 = vmatpush.bf16.msra.mxu0 %v2138
        %2164 = vmatpush.bf16.msra.mxu0 %v2137
        %2165 = vmatmul.bf16.gmra.mxu0 %v2141
        %v2166 = vpop.f32.mrf.mxu0
        %v2167 = vadd.f32 0.0, %v2166
        %v2168 = vpop.f32.mrf.mxu0
        %v2169 = vadd.f32 0.0, %v2168
        %2170 = vmatmul.bf16.gmra.mxu0 %v2143
        %v2171 = vpop.f32.mrf.mxu0
        %v2172 = vadd.f32 0.0, %v2171
        %v2173 = vpop.f32.mrf.mxu0
        %v2174 = vadd.f32 0.0, %v2173
        %2175 = vmatmul.bf16.gmra.mxu0 %v2145
        %v2176 = vpop.f32.mrf.mxu0
        %v2177 = vadd.f32 0.0, %v2176
        %v2178 = vpop.f32.mrf.mxu0
        %v2179 = vadd.f32 0.0, %v2178
        %2180 = vmatmul.bf16.gmra.mxu0 %v2147
        %v2181 = vpop.f32.mrf.mxu0
        %v2182 = vadd.f32 0.0, %v2181
        %v2183 = vpop.f32.mrf.mxu0
        %v2184 = vadd.f32 0.0, %v2183
        %2185 = vmatmul.bf16.gmra.mxu0 %v2149
        %v2186 = vpop.f32.mrf.mxu0
        %v2187 = vadd.f32 0.0, %v2186
        %v2188 = vpop.f32.mrf.mxu0
        %v2189 = vadd.f32 0.0, %v2188
        %2190 = vmatmul.bf16.gmra.mxu0 %v2151
        %v2191 = vpop.f32.mrf.mxu0
        %v2192 = vadd.f32 0.0, %v2191
        %v2193 = vpop.f32.mrf.mxu0
        %v2194 = vadd.f32 0.0, %v2193
        %2195 = vmatmul.bf16.gmra.mxu0 %v2153
        %v2196 = vpop.f32.mrf.mxu0
        %v2197 = vadd.f32 0.0, %v2196
        %v2198 = vpop.f32.mrf.mxu0
        %v2199 = vadd.f32 0.0, %v2198
        %2200 = vmatmul.bf16.gmra.mxu0 %v2155
        %v2201 = vpop.f32.mrf.mxu0
        %v2202 = vadd.f32 0.0, %v2201
        %v2203 = vpop.f32.mrf.mxu0
        %v2204 = vadd.f32 0.0, %v2203
        %2205 = vdwg.mxu0
        %v2206 = vadd.f32 %v2108, %v2167
        %v2207 = vadd.f32 %v2109, %v2169
        %v2208 = vadd.f32 %v2110, %v2172
        %v2209 = vadd.f32 %v2111, %v2174
        %v2210 = vadd.f32 %v2112, %v2177
        %v2211 = vadd.f32 %v2113, %v2179
        %v2212 = vadd.f32 %v2114, %v2182
        %v2213 = vadd.f32 %v2115, %v2184
        %v2214 = vadd.f32 %v2116, %v2187
        %v2215 = vadd.f32 %v2117, %v2189
        %v2216 = vadd.f32 %v2118, %v2192
        %v2217 = vadd.f32 %v2119, %v2194
        %v2218 = vadd.f32 %v2120, %v2197
        %v2219 = vadd.f32 %v2121, %v2199
        %v2220 = vadd.f32 %v2122, %v2202
        %v2221 = vadd.f32 %v2123, %v2204
        %v2222 = vrot.slane %v1950, 1
        %v2223 = vor.u32 %v1947, %v2222
        %v2224 = vrot.slane %v1957, 1
        %v2225 = vor.u32 %v1954, %v2224
        %v2226 = vrot.slane %v1964, 1
        %v2227 = vor.u32 %v1961, %v2226
        %v2228 = vrot.slane %v1971, 1
        %v2229 = vor.u32 %v1968, %v2228
        %v2230 = vrot.slane %v1978, 1
        %v2231 = vor.u32 %v1975, %v2230
        %v2232 = vrot.slane %v1985, 1
        %v2233 = vor.u32 %v1982, %v2232
        %v2234 = vrot.slane %v1992, 1
        %v2235 = vor.u32 %v1989, %v2234
        %v2236 = vrot.slane %v1999, 1
        %v2237 = vor.u32 %v1996, %v2236
        %v2246 = vsel %vm503, %v2223, 0
        %v2247 = vsel %vm503, %v2225, 0
        %v2248 = vsel %vm503, %v2227, 0
        %v2249 = vsel %vm503, %v2229, 0
        %v2250 = vsel %vm503, %v2231, 0
        %v2251 = vsel %vm503, %v2233, 0
        %v2252 = vsel %vm503, %v2235, 0
        %v2253 = vsel %vm503, %v2237, 0
        %s2254 = scalar_lea.vmem %s4, 80
        %v2255 = vld [vmem:[%s2254] sm:$0xf]
        %v2256 = vld [vmem:[%s2254 + $0x4] sm:$0xf]
        %v2257 = vld [vmem:[%s2254 + $0x8] sm:$0xf]
        %v2258 = vld [vmem:[%s2254 + $0xc] sm:$0xf]
        %v2263 = vunpack.c.l.b16 %v2255
        %v2264 = vunpack.c.l.b16 %v2256
        %v2265 = vunpack.c.l.b16 %v2257
        %v2266 = vunpack.c.l.b16 %v2258
        %v2267 = vpack.c.b16 %v2264, %v2263
        %v2268 = vpack.c.b16 %v2266, %v2265
        %v2272 = vsel %vm1600, %v2246, 0
        %v2275 = vsel %vm1600, %v2247, 0
        %v2278 = vsel %vm1600, %v2248, 0
        %v2281 = vsel %vm1600, %v2249, 0
        %v2284 = vsel %vm1600, %v2250, 0
        %v2287 = vsel %vm1600, %v2251, 0
        %v2290 = vsel %vm1600, %v2252, 0
        %v2293 = vsel %vm1600, %v2253, 0
        %2295 = vmatpush.bf16.msra.mxu0 0
        %2296 = vmatpush.bf16.msra.mxu0 0
        %2297 = vmatpush.bf16.msra.mxu0 0
        %2298 = vmatpush.bf16.msra.mxu0 0
        %2299 = vmatpush.bf16.msra.mxu0 0
        %2300 = vmatpush.bf16.msra.mxu0 0
        %2301 = vmatpush.bf16.msra.mxu0 %v2268
        %2302 = vmatpush.bf16.msra.mxu0 %v2267
        %2303 = vmatmul.bf16.gmra.mxu0 %v2272
        %v2304 = vpop.f32.mrf.mxu0
        %v2305 = vadd.f32 0.0, %v2304
        %v2306 = vpop.f32.mrf.mxu0
        %v2307 = vadd.f32 0.0, %v2306
        %2308 = vmatmul.bf16.gmra.mxu0 %v2275
        %v2309 = vpop.f32.mrf.mxu0
        %v2310 = vadd.f32 0.0, %v2309
        %v2311 = vpop.f32.mrf.mxu0
        %v2312 = vadd.f32 0.0, %v2311
        %2313 = vmatmul.bf16.gmra.mxu0 %v2278
        %v2314 = vpop.f32.mrf.mxu0
        %v2315 = vadd.f32 0.0, %v2314
        %v2316 = vpop.f32.mrf.mxu0
        %v2317 = vadd.f32 0.0, %v2316
        %2318 = vmatmul.bf16.gmra.mxu0 %v2281
        %v2319 = vpop.f32.mrf.mxu0
        %v2320 = vadd.f32 0.0, %v2319
        %v2321 = vpop.f32.mrf.mxu0
        %v2322 = vadd.f32 0.0, %v2321
        %2323 = vmatmul.bf16.gmra.mxu0 %v2284
        %v2324 = vpop.f32.mrf.mxu0
        %v2325 = vadd.f32 0.0, %v2324
        %v2326 = vpop.f32.mrf.mxu0
        %v2327 = vadd.f32 0.0, %v2326
        %2328 = vmatmul.bf16.gmra.mxu0 %v2287
        %v2329 = vpop.f32.mrf.mxu0
        %v2330 = vadd.f32 0.0, %v2329
        %v2331 = vpop.f32.mrf.mxu0
        %v2332 = vadd.f32 0.0, %v2331
        %2333 = vmatmul.bf16.gmra.mxu0 %v2290
        %v2334 = vpop.f32.mrf.mxu0
        %v2335 = vadd.f32 0.0, %v2334
        %v2336 = vpop.f32.mrf.mxu0
        %v2337 = vadd.f32 0.0, %v2336
        %2338 = vmatmul.bf16.gmra.mxu0 %v2293
        %v2339 = vpop.f32.mrf.mxu0
        %v2340 = vadd.f32 0.0, %v2339
        %v2341 = vpop.f32.mrf.mxu0
        %v2342 = vadd.f32 0.0, %v2341
        %2343 = vdwg.mxu0
        %v2344 = vadd.f32 %v2206, %v2305
        %v2345 = vadd.f32 %v2207, %v2307
        %v2346 = vadd.f32 %v2208, %v2310
        %v2347 = vadd.f32 %v2209, %v2312
        %v2348 = vadd.f32 %v2210, %v2315
        %v2349 = vadd.f32 %v2211, %v2317
        %v2350 = vadd.f32 %v2212, %v2320
        %v2351 = vadd.f32 %v2213, %v2322
        %v2352 = vadd.f32 %v2214, %v2325
        %v2353 = vadd.f32 %v2215, %v2327
        %v2354 = vadd.f32 %v2216, %v2330
        %v2355 = vadd.f32 %v2217, %v2332
        %v2356 = vadd.f32 %v2218, %v2335
        %v2357 = vadd.f32 %v2219, %v2337
        %v2358 = vadd.f32 %v2220, %v2340
        %v2359 = vadd.f32 %v2221, %v2342
        %s2360 = scalar_lea.vmem [#allocation2], 16
        %v2361 = vld [vmem:[%s2360] sm:$0xf]
        %v2362 = vld [vmem:[%s2360 + $0x4] sm:$0xf]
        %v2363 = vld [vmem:[%s2360 + $0x8] sm:$0xf]
        %v2364 = vld [vmem:[%s2360 + $0xc] sm:$0xf]
        %v2365 = vld [vmem:[%s2360 + $0x10] sm:$0xf]
        %v2366 = vld [vmem:[%s2360 + $0x14] sm:$0xf]
        %v2367 = vld [vmem:[%s2360 + $0x18] sm:$0xf]
        %v2368 = vld [vmem:[%s2360 + $0x1c] sm:$0xf]
        %v2369 = vld [vmem:[%s2360 + $0x20] sm:$0xf]
        %v2370 = vld [vmem:[%s2360 + $0x24] sm:$0xf]
        %v2371 = vld [vmem:[%s2360 + $0x28] sm:$0xf]
        %v2372 = vld [vmem:[%s2360 + $0x2c] sm:$0xf]
        %v2373 = vld [vmem:[%s2360 + $0x30] sm:$0xf]
        %v2374 = vld [vmem:[%s2360 + $0x34] sm:$0xf]
        %v2375 = vld [vmem:[%s2360 + $0x38] sm:$0xf]
        %v2376 = vld [vmem:[%s2360 + $0x3c] sm:$0xf]
        %v2393 = vunpack.c.l.b16 %v2361
        %v2394 = vunpack.c.l.b16 %v2362
        %v2395 = vunpack.c.l.b16 %v2363
        %v2396 = vunpack.c.l.b16 %v2364
        %v2397 = vunpack.c.l.b16 %v2365
        %v2398 = vunpack.c.l.b16 %v2366
        %v2399 = vunpack.c.l.b16 %v2367
        %v2400 = vunpack.c.l.b16 %v2368
        %v2401 = vunpack.c.l.b16 %v2369
        %v2402 = vunpack.c.l.b16 %v2370
        %v2403 = vunpack.c.l.b16 %v2371
        %v2404 = vunpack.c.l.b16 %v2372
        %v2405 = vunpack.c.l.b16 %v2373
        %v2406 = vunpack.c.l.b16 %v2374
        %v2407 = vunpack.c.l.b16 %v2375
        %v2408 = vunpack.c.l.b16 %v2376
        %v2409 = vpack.c.b16 %v2394, %v2393
        %v2410 = vpack.c.b16 %v2396, %v2395
        %v2411 = vpack.c.b16 %v2398, %v2397
        %v2412 = vpack.c.b16 %v2400, %v2399
        %v2413 = vpack.c.b16 %v2402, %v2401
        %v2414 = vpack.c.b16 %v2404, %v2403
        %v2415 = vpack.c.b16 %v2406, %v2405
        %v2416 = vpack.c.b16 %v2408, %v2407
        %v2418 = vshrl.u32 %v2409, 16
        %v2420 = vrot.slane %v2418, 7
        %v2421 = vshll.u32 %v2409, 16
        %v2423 = vor.u32 %v2420, %v2421
        %v2425 = vshrl.u32 %v2410, 16
        %v2427 = vrot.slane %v2425, 7
        %v2428 = vshll.u32 %v2410, 16
        %v2430 = vor.u32 %v2427, %v2428
        %v2432 = vshrl.u32 %v2411, 16
        %v2434 = vrot.slane %v2432, 7
        %v2435 = vshll.u32 %v2411, 16
        %v2437 = vor.u32 %v2434, %v2435
        %v2439 = vshrl.u32 %v2412, 16
        %v2441 = vrot.slane %v2439, 7
        %v2442 = vshll.u32 %v2412, 16
        %v2444 = vor.u32 %v2441, %v2442
        %v2446 = vshrl.u32 %v2413, 16
        %v2448 = vrot.slane %v2446, 7
        %v2449 = vshll.u32 %v2413, 16
        %v2451 = vor.u32 %v2448, %v2449
        %v2453 = vshrl.u32 %v2414, 16
        %v2455 = vrot.slane %v2453, 7
        %v2456 = vshll.u32 %v2414, 16
        %v2458 = vor.u32 %v2455, %v2456
        %v2460 = vshrl.u32 %v2415, 16
        %v2462 = vrot.slane %v2460, 7
        %v2463 = vshll.u32 %v2415, 16
        %v2465 = vor.u32 %v2462, %v2463
        %v2467 = vshrl.u32 %v2416, 16
        %v2469 = vrot.slane %v2467, 7
        %v2470 = vshll.u32 %v2416, 16
        %v2472 = vor.u32 %v2469, %v2470
        %v2481 = vsel %vm452, 0, %v2423
        %v2482 = vsel %vm452, 0, %v2430
        %v2483 = vsel %vm452, 0, %v2437
        %v2484 = vsel %vm452, 0, %v2444
        %v2485 = vsel %vm452, 0, %v2451
        %v2486 = vsel %vm452, 0, %v2458
        %v2487 = vsel %vm452, 0, %v2465
        %v2488 = vsel %vm452, 0, %v2472
        %s2489 = scalar_lea.vmem %s4, 96
        %v2490 = vld [vmem:[%s2489] sm:$0xf]
        %v2491 = vld [vmem:[%s2489 + $0x4] sm:$0xf]
        %v2492 = vld [vmem:[%s2489 + $0x8] sm:$0xf]
        %v2493 = vld [vmem:[%s2489 + $0xc] sm:$0xf]
        %v2498 = vunpack.c.l.b16 %v2490
        %v2499 = vunpack.c.l.b16 %v2491
        %v2500 = vunpack.c.l.b16 %v2492
        %v2501 = vunpack.c.l.b16 %v2493
        %v2502 = vpack.c.b16 %v2499, %v2498
        %v2503 = vpack.c.b16 %v2501, %v2500
        %v2507 = vsel %vm1600, %v2481, 0
        %v2510 = vsel %vm1600, %v2482, 0
        %v2513 = vsel %vm1600, %v2483, 0
        %v2516 = vsel %vm1600, %v2484, 0
        %v2519 = vsel %vm1600, %v2485, 0
        %v2522 = vsel %vm1600, %v2486, 0
        %v2525 = vsel %vm1600, %v2487, 0
        %v2528 = vsel %vm1600, %v2488, 0
        %2530 = vmatpush.bf16.msra.mxu0 0
        %2531 = vmatpush.bf16.msra.mxu0 0
        %2532 = vmatpush.bf16.msra.mxu0 0
        %2533 = vmatpush.bf16.msra.mxu0 0
        %2534 = vmatpush.bf16.msra.mxu0 0
        %2535 = vmatpush.bf16.msra.mxu0 0
        %2536 = vmatpush.bf16.msra.mxu0 %v2503
        %2537 = vmatpush.bf16.msra.mxu0 %v2502
        %2538 = vmatmul.bf16.gmra.mxu0 %v2507
        %v2539 = vpop.f32.mrf.mxu0
        %v2540 = vadd.f32 0.0, %v2539
        %v2541 = vpop.f32.mrf.mxu0
        %v2542 = vadd.f32 0.0, %v2541
        %2543 = vmatmul.bf16.gmra.mxu0 %v2510
        %v2544 = vpop.f32.mrf.mxu0
        %v2545 = vadd.f32 0.0, %v2544
        %v2546 = vpop.f32.mrf.mxu0
        %v2547 = vadd.f32 0.0, %v2546
        %2548 = vmatmul.bf16.gmra.mxu0 %v2513
        %v2549 = vpop.f32.mrf.mxu0
        %v2550 = vadd.f32 0.0, %v2549
        %v2551 = vpop.f32.mrf.mxu0
        %v2552 = vadd.f32 0.0, %v2551
        %2553 = vmatmul.bf16.gmra.mxu0 %v2516
        %v2554 = vpop.f32.mrf.mxu0
        %v2555 = vadd.f32 0.0, %v2554
        %v2556 = vpop.f32.mrf.mxu0
        %v2557 = vadd.f32 0.0, %v2556
        %2558 = vmatmul.bf16.gmra.mxu0 %v2519
        %v2559 = vpop.f32.mrf.mxu0
        %v2560 = vadd.f32 0.0, %v2559
        %v2561 = vpop.f32.mrf.mxu0
        %v2562 = vadd.f32 0.0, %v2561
        %2563 = vmatmul.bf16.gmra.mxu0 %v2522
        %v2564 = vpop.f32.mrf.mxu0
        %v2565 = vadd.f32 0.0, %v2564
        %v2566 = vpop.f32.mrf.mxu0
        %v2567 = vadd.f32 0.0, %v2566
        %2568 = vmatmul.bf16.gmra.mxu0 %v2525
        %v2569 = vpop.f32.mrf.mxu0
        %v2570 = vadd.f32 0.0, %v2569
        %v2571 = vpop.f32.mrf.mxu0
        %v2572 = vadd.f32 0.0, %v2571
        %2573 = vmatmul.bf16.gmra.mxu0 %v2528
        %v2574 = vpop.f32.mrf.mxu0
        %v2575 = vadd.f32 0.0, %v2574
        %v2576 = vpop.f32.mrf.mxu0
        %v2577 = vadd.f32 0.0, %v2576
        %2578 = vdwg.mxu0
        %v2579 = vadd.f32 %v2344, %v2540
        %v2580 = vadd.f32 %v2345, %v2542
        %v2581 = vadd.f32 %v2346, %v2545
        %v2582 = vadd.f32 %v2347, %v2547
        %v2583 = vadd.f32 %v2348, %v2550
        %v2584 = vadd.f32 %v2349, %v2552
        %v2585 = vadd.f32 %v2350, %v2555
        %v2586 = vadd.f32 %v2351, %v2557
        %v2587 = vadd.f32 %v2352, %v2560
        %v2588 = vadd.f32 %v2353, %v2562
        %v2589 = vadd.f32 %v2354, %v2565
        %v2590 = vadd.f32 %v2355, %v2567
        %v2591 = vadd.f32 %v2356, %v2570
        %v2592 = vadd.f32 %v2357, %v2572
        %v2593 = vadd.f32 %v2358, %v2575
        %v2594 = vadd.f32 %v2359, %v2577
        %s2595 = scalar_lea.vmem %s4, 112
        %v2596 = vld [vmem:[%s2595] sm:$0xf]
        %v2597 = vld [vmem:[%s2595 + $0x4] sm:$0xf]
        %v2598 = vld [vmem:[%s2595 + $0x8] sm:$0xf]
        %v2599 = vld [vmem:[%s2595 + $0xc] sm:$0xf]
        %v2604 = vunpack.c.l.b16 %v2596
        %v2605 = vunpack.c.l.b16 %v2597
        %v2606 = vunpack.c.l.b16 %v2598
        %v2607 = vunpack.c.l.b16 %v2599
        %v2608 = vpack.c.b16 %v2605, %v2604
        %v2609 = vpack.c.b16 %v2607, %v2606
        %v2612 = vsel %vm1600, %v2409, 0
        %v2614 = vsel %vm1600, %v2410, 0
        %v2616 = vsel %vm1600, %v2411, 0
        %v2618 = vsel %vm1600, %v2412, 0
        %v2620 = vsel %vm1600, %v2413, 0
        %v2622 = vsel %vm1600, %v2414, 0
        %v2624 = vsel %vm1600, %v2415, 0
        %v2626 = vsel %vm1600, %v2416, 0
        %2628 = vmatpush.bf16.msra.mxu0 0
        %2629 = vmatpush.bf16.msra.mxu0 0
        %2630 = vmatpush.bf16.msra.mxu0 0
        %2631 = vmatpush.bf16.msra.mxu0 0
        %2632 = vmatpush.bf16.msra.mxu0 0
        %2633 = vmatpush.bf16.msra.mxu0 0
        %2634 = vmatpush.bf16.msra.mxu0 %v2609
        %2635 = vmatpush.bf16.msra.mxu0 %v2608
        %2636 = vmatmul.bf16.gmra.mxu0 %v2612
        %v2637 = vpop.f32.mrf.mxu0
        %v2638 = vadd.f32 0.0, %v2637
        %v2639 = vpop.f32.mrf.mxu0
        %v2640 = vadd.f32 0.0, %v2639
        %2641 = vmatmul.bf16.gmra.mxu0 %v2614
        %v2642 = vpop.f32.mrf.mxu0
        %v2643 = vadd.f32 0.0, %v2642
        %v2644 = vpop.f32.mrf.mxu0
        %v2645 = vadd.f32 0.0, %v2644
        %2646 = vmatmul.bf16.gmra.mxu0 %v2616
        %v2647 = vpop.f32.mrf.mxu0
        %v2648 = vadd.f32 0.0, %v2647
        %v2649 = vpop.f32.mrf.mxu0
        %v2650 = vadd.f32 0.0, %v2649
        %2651 = vmatmul.bf16.gmra.mxu0 %v2618
        %v2652 = vpop.f32.mrf.mxu0
        %v2653 = vadd.f32 0.0, %v2652
        %v2654 = vpop.f32.mrf.mxu0
        %v2655 = vadd.f32 0.0, %v2654
        %2656 = vmatmul.bf16.gmra.mxu0 %v2620
        %v2657 = vpop.f32.mrf.mxu0
        %v2658 = vadd.f32 0.0, %v2657
        %v2659 = vpop.f32.mrf.mxu0
        %v2660 = vadd.f32 0.0, %v2659
        %2661 = vmatmul.bf16.gmra.mxu0 %v2622
        %v2662 = vpop.f32.mrf.mxu0
        %v2663 = vadd.f32 0.0, %v2662
        %v2664 = vpop.f32.mrf.mxu0
        %v2665 = vadd.f32 0.0, %v2664
        %2666 = vmatmul.bf16.gmra.mxu0 %v2624
        %v2667 = vpop.f32.mrf.mxu0
        %v2668 = vadd.f32 0.0, %v2667
        %v2669 = vpop.f32.mrf.mxu0
        %v2670 = vadd.f32 0.0, %v2669
        %2671 = vmatmul.bf16.gmra.mxu0 %v2626
        %v2672 = vpop.f32.mrf.mxu0
        %v2673 = vadd.f32 0.0, %v2672
        %v2674 = vpop.f32.mrf.mxu0
        %v2675 = vadd.f32 0.0, %v2674
        %2676 = vdwg.mxu0
        %v2677 = vadd.f32 %v2579, %v2638
        %v2678 = vadd.f32 %v2580, %v2640
        %v2679 = vadd.f32 %v2581, %v2643
        %v2680 = vadd.f32 %v2582, %v2645
        %v2681 = vadd.f32 %v2583, %v2648
        %v2682 = vadd.f32 %v2584, %v2650
        %v2683 = vadd.f32 %v2585, %v2653
        %v2684 = vadd.f32 %v2586, %v2655
        %v2685 = vadd.f32 %v2587, %v2658
        %v2686 = vadd.f32 %v2588, %v2660
        %v2687 = vadd.f32 %v2589, %v2663
        %v2688 = vadd.f32 %v2590, %v2665
        %v2689 = vadd.f32 %v2591, %v2668
        %v2690 = vadd.f32 %v2592, %v2670
        %v2691 = vadd.f32 %v2593, %v2673
        %v2692 = vadd.f32 %v2594, %v2675
        %v2693 = vrot.slane %v2421, 1
        %v2694 = vor.u32 %v2418, %v2693
        %v2695 = vrot.slane %v2428, 1
        %v2696 = vor.u32 %v2425, %v2695
        %v2697 = vrot.slane %v2435, 1
        %v2698 = vor.u32 %v2432, %v2697
        %v2699 = vrot.slane %v2442, 1
        %v2700 = vor.u32 %v2439, %v2699
        %v2701 = vrot.slane %v2449, 1
        %v2702 = vor.u32 %v2446, %v2701
        %v2703 = vrot.slane %v2456, 1
        %v2704 = vor.u32 %v2453, %v2703
        %v2705 = vrot.slane %v2463, 1
        %v2706 = vor.u32 %v2460, %v2705
        %v2707 = vrot.slane %v2470, 1
        %v2708 = vor.u32 %v2467, %v2707
        %v2717 = vsel %vm503, %v2694, 0
        %v2718 = vsel %vm503, %v2696, 0
        %v2719 = vsel %vm503, %v2698, 0
        %v2720 = vsel %vm503, %v2700, 0
        %v2721 = vsel %vm503, %v2702, 0
        %v2722 = vsel %vm503, %v2704, 0
        %v2723 = vsel %vm503, %v2706, 0
        %v2724 = vsel %vm503, %v2708, 0
        %s2725 = scalar_lea.vmem %s4, 128
        %v2726 = vld [vmem:[%s2725] sm:$0xf]
        %v2727 = vld [vmem:[%s2725 + $0x4] sm:$0xf]
        %v2728 = vld [vmem:[%s2725 + $0x8] sm:$0xf]
        %v2729 = vld [vmem:[%s2725 + $0xc] sm:$0xf]
        %v2734 = vunpack.c.l.b16 %v2726
        %v2735 = vunpack.c.l.b16 %v2727
        %v2736 = vunpack.c.l.b16 %v2728
        %v2737 = vunpack.c.l.b16 %v2729
        %v2738 = vpack.c.b16 %v2735, %v2734
        %v2739 = vpack.c.b16 %v2737, %v2736
        %v2743 = vsel %vm1600, %v2717, 0
        %v2746 = vsel %vm1600, %v2718, 0
        %v2749 = vsel %vm1600, %v2719, 0
        %v2752 = vsel %vm1600, %v2720, 0
        %v2755 = vsel %vm1600, %v2721, 0
        %v2758 = vsel %vm1600, %v2722, 0
        %v2761 = vsel %vm1600, %v2723, 0
        %v2764 = vsel %vm1600, %v2724, 0
        %2766 = vmatpush.bf16.msra.mxu0 0
        %2767 = vmatpush.bf16.msra.mxu0 0
        %2768 = vmatpush.bf16.msra.mxu0 0
        %2769 = vmatpush.bf16.msra.mxu0 0
        %2770 = vmatpush.bf16.msra.mxu0 0
        %2771 = vmatpush.bf16.msra.mxu0 0
        %2772 = vmatpush.bf16.msra.mxu0 %v2739
        %2773 = vmatpush.bf16.msra.mxu0 %v2738
        %2774 = vmatmul.bf16.gmra.mxu0 %v2743
        %v2775 = vpop.f32.mrf.mxu0
        %v2776 = vadd.f32 0.0, %v2775
        %v2777 = vpop.f32.mrf.mxu0
        %v2778 = vadd.f32 0.0, %v2777
        %2779 = vmatmul.bf16.gmra.mxu0 %v2746
        %v2780 = vpop.f32.mrf.mxu0
        %v2781 = vadd.f32 0.0, %v2780
        %v2782 = vpop.f32.mrf.mxu0
        %v2783 = vadd.f32 0.0, %v2782
        %2784 = vmatmul.bf16.gmra.mxu0 %v2749
        %v2785 = vpop.f32.mrf.mxu0
        %v2786 = vadd.f32 0.0, %v2785
        %v2787 = vpop.f32.mrf.mxu0
        %v2788 = vadd.f32 0.0, %v2787
        %2789 = vmatmul.bf16.gmra.mxu0 %v2752
        %v2790 = vpop.f32.mrf.mxu0
        %v2791 = vadd.f32 0.0, %v2790
        %v2792 = vpop.f32.mrf.mxu0
        %v2793 = vadd.f32 0.0, %v2792
        %2794 = vmatmul.bf16.gmra.mxu0 %v2755
        %v2795 = vpop.f32.mrf.mxu0
        %v2796 = vadd.f32 0.0, %v2795
        %v2797 = vpop.f32.mrf.mxu0
        %v2798 = vadd.f32 0.0, %v2797
        %2799 = vmatmul.bf16.gmra.mxu0 %v2758
        %v2800 = vpop.f32.mrf.mxu0
        %v2801 = vadd.f32 0.0, %v2800
        %v2802 = vpop.f32.mrf.mxu0
        %v2803 = vadd.f32 0.0, %v2802
        %2804 = vmatmul.bf16.gmra.mxu0 %v2761
        %v2805 = vpop.f32.mrf.mxu0
        %v2806 = vadd.f32 0.0, %v2805
        %v2807 = vpop.f32.mrf.mxu0
        %v2808 = vadd.f32 0.0, %v2807
        %2809 = vmatmul.bf16.gmra.mxu0 %v2764
        %v2810 = vpop.f32.mrf.mxu0
        %v2811 = vadd.f32 0.0, %v2810
        %v2812 = vpop.f32.mrf.mxu0
        %v2813 = vadd.f32 0.0, %v2812
        %2814 = vdwg.mxu0
        %v2815 = vadd.f32 %v2677, %v2776
        %v2816 = vadd.f32 %v2678, %v2778
        %v2817 = vadd.f32 %v2679, %v2781
        %v2818 = vadd.f32 %v2680, %v2783
        %v2819 = vadd.f32 %v2681, %v2786
        %v2820 = vadd.f32 %v2682, %v2788
        %v2821 = vadd.f32 %v2683, %v2791
        %v2822 = vadd.f32 %v2684, %v2793
        %v2823 = vadd.f32 %v2685, %v2796
        %v2824 = vadd.f32 %v2686, %v2798
        %v2825 = vadd.f32 %v2687, %v2801
        %v2826 = vadd.f32 %v2688, %v2803
        %v2827 = vadd.f32 %v2689, %v2806
        %v2828 = vadd.f32 %v2690, %v2808
        %v2829 = vadd.f32 %v2691, %v2811
        %v2830 = vadd.f32 %v2692, %v2813
        %v2831 = vld [vmem:[%s5] sm:$0x1]
        %v2833 = vperm.slane %v2831, 0
        %v2835 = vadd.f32 %v2815, %v2833
        %v2836 = vadd.f32 %v2816, %v2833
        %v2837 = vadd.f32 %v2817, %v2833
        %v2838 = vadd.f32 %v2818, %v2833
        %v2839 = vadd.f32 %v2819, %v2833
        %v2840 = vadd.f32 %v2820, %v2833
        %v2841 = vadd.f32 %v2821, %v2833
        %v2842 = vadd.f32 %v2822, %v2833
        %v2843 = vadd.f32 %v2823, %v2833
        %v2844 = vadd.f32 %v2824, %v2833
        %v2845 = vadd.f32 %v2825, %v2833
        %v2846 = vadd.f32 %v2826, %v2833
        %v2847 = vadd.f32 %v2827, %v2833
        %v2848 = vadd.f32 %v2828, %v2833
        %v2849 = vadd.f32 %v2829, %v2833
        %v2850 = vadd.f32 %v2830, %v2833
        %v2851 = vunpack.c.l.bf16 %v1890
        %v2852 = vunpack.c.l.bf16 %v1891
        %v2853 = vunpack.c.l.bf16 %v1892
        %v2854 = vunpack.c.l.bf16 %v1893
        %v2855 = vunpack.c.l.bf16 %v1894
        %v2856 = vunpack.c.l.bf16 %v1895
        %v2857 = vunpack.c.l.bf16 %v1896
        %v2858 = vunpack.c.l.bf16 %v1897
        %v2859 = vunpack.c.l.bf16 %v1898
        %v2860 = vunpack.c.l.bf16 %v1899
        %v2861 = vunpack.c.l.bf16 %v1900
        %v2862 = vunpack.c.l.bf16 %v1901
        %v2863 = vunpack.c.l.bf16 %v1902
        %v2864 = vunpack.c.l.bf16 %v1903
        %v2865 = vunpack.c.l.bf16 %v1904
        %v2866 = vunpack.c.l.bf16 %v1905
        %v2867 = vmul.f32 %v2835, %v2851
        %v2868 = vmul.f32 %v2836, %v2852
        %v2869 = vmul.f32 %v2837, %v2853
        %v2870 = vmul.f32 %v2838, %v2854
        %v2871 = vmul.f32 %v2839, %v2855
        %v2872 = vmul.f32 %v2840, %v2856
        %v2873 = vmul.f32 %v2841, %v2857
        %v2874 = vmul.f32 %v2842, %v2858
        %v2875 = vmul.f32 %v2843, %v2859
        %v2876 = vmul.f32 %v2844, %v2860
        %v2877 = vmul.f32 %v2845, %v2861
        %v2878 = vmul.f32 %v2846, %v2862
        %v2879 = vmul.f32 %v2847, %v2863
        %v2880 = vmul.f32 %v2848, %v2864
        %v2881 = vmul.f32 %v2849, %v2865
        %v2882 = vmul.f32 %v2850, %v2866
        %v2883 = vadd.f32 %v2867, %v2835
        %v2884 = vadd.f32 %v2868, %v2836
        %v2885 = vadd.f32 %v2869, %v2837
        %v2886 = vadd.f32 %v2870, %v2838
        %v2887 = vadd.f32 %v2871, %v2839
        %v2888 = vadd.f32 %v2872, %v2840
        %v2889 = vadd.f32 %v2873, %v2841
        %v2890 = vadd.f32 %v2874, %v2842
        %v2891 = vadd.f32 %v2875, %v2843
        %v2892 = vadd.f32 %v2876, %v2844
        %v2893 = vadd.f32 %v2877, %v2845
        %v2894 = vadd.f32 %v2878, %v2846
        %v2895 = vadd.f32 %v2879, %v2847
        %v2896 = vadd.f32 %v2880, %v2848
        %v2897 = vadd.f32 %v2881, %v2849
        %v2898 = vadd.f32 %v2882, %v2850
        %v2899 = vmax.f32 %v2883, 0.0
        %v2900 = vmax.f32 %v2884, 0.0
        %v2901 = vmax.f32 %v2885, 0.0
        %v2902 = vmax.f32 %v2886, 0.0
        %v2903 = vmax.f32 %v2887, 0.0
        %v2904 = vmax.f32 %v2888, 0.0
        %v2905 = vmax.f32 %v2889, 0.0
        %v2906 = vmax.f32 %v2890, 0.0
        %v2907 = vmax.f32 %v2891, 0.0
        %v2908 = vmax.f32 %v2892, 0.0
        %v2909 = vmax.f32 %v2893, 0.0
        %v2910 = vmax.f32 %v2894, 0.0
        %v2911 = vmax.f32 %v2895, 0.0
        %v2912 = vmax.f32 %v2896, 0.0
        %v2913 = vmax.f32 %v2897, 0.0
        %v2914 = vmax.f32 %v2898, 0.0
        %v2915 = vpack.c.bf16 %v2899, %v2899
        %v2916 = vpack.c.bf16 %v2900, %v2900
        %v2917 = vpack.c.bf16 %v2901, %v2901
        %v2918 = vpack.c.bf16 %v2902, %v2902
        %v2919 = vpack.c.bf16 %v2903, %v2903
        %v2920 = vpack.c.bf16 %v2904, %v2904
        %v2921 = vpack.c.bf16 %v2905, %v2905
        %v2922 = vpack.c.bf16 %v2906, %v2906
        %v2923 = vpack.c.bf16 %v2907, %v2907
        %v2924 = vpack.c.bf16 %v2908, %v2908
        %v2925 = vpack.c.bf16 %v2909, %v2909
        %v2926 = vpack.c.bf16 %v2910, %v2910
        %v2927 = vpack.c.bf16 %v2911, %v2911
        %v2928 = vpack.c.bf16 %v2912, %v2912
        %v2929 = vpack.c.bf16 %v2913, %v2913
        %v2930 = vpack.c.bf16 %v2914, %v2914
        %2931 = vst.msk [vmem:[%s258] sm:$0xf] %vm1417, %v2915
        %2932 = vst.msk [vmem:[%s258 + $0x4] sm:$0xf] %vm1417, %v2916
        %2933 = vst.msk [vmem:[%s258 + $0x8] sm:$0xf] %vm1417, %v2917
        %2934 = vst.msk [vmem:[%s258 + $0xc] sm:$0xf] %vm1417, %v2918
        %2935 = vst.msk [vmem:[%s258 + $0x10] sm:$0xf] %vm1417, %v2919
        %2936 = vst.msk [vmem:[%s258 + $0x14] sm:$0xf] %vm1417, %v2920
        %2937 = vst.msk [vmem:[%s258 + $0x18] sm:$0xf] %vm1417, %v2921
        %2938 = vst.msk [vmem:[%s258 + $0x1c] sm:$0xf] %vm1417, %v2922
        %2939 = vst.msk [vmem:[%s258 + $0x20] sm:$0xf] %vm1417, %v2923
        %2940 = vst.msk [vmem:[%s258 + $0x24] sm:$0xf] %vm1417, %v2924
        %2941 = vst.msk [vmem:[%s258 + $0x28] sm:$0xf] %vm1417, %v2925
        %2942 = vst.msk [vmem:[%s258 + $0x2c] sm:$0xf] %vm1417, %v2926
        %2943 = vst.msk [vmem:[%s258 + $0x30] sm:$0xf] %vm1417, %v2927
        %2944 = vst.msk [vmem:[%s258 + $0x34] sm:$0xf] %vm1417, %v2928
        %2945 = vst.msk [vmem:[%s258 + $0x38] sm:$0xf] %vm1417, %v2929
        %2946 = vst.msk [vmem:[%s258 + $0x3c] sm:$0xf] %vm1417, %v2930
        %s2947 = sand.u32 %s173, 1
        %s2948 = scalar_lea.sflag [#allocation4], %s2947
        %s2949 = sand.u32 %s173, 1
        %s2950 = smul.addr %s2949, 64
        %s2951 = scalar_lea.vmem [#allocation3], %s2950
        // Predicated region
        $region53: #{tpu_custom_call.1} parent=43 // pred_check
          %p2952 = pneg %p183
        $region54: #{tpu_custom_call.1} parent=43 // pred_check_branch
          %2954 = sbr.rel (%p2952) target = $region56
        $region55: #{tpu_custom_call.1} parent=43 // pred_region
          %s2955 = smul.u32 8, %s25
          %2957 = vsyncadd %s2948, 0
          %s2958 = smul.addr %s2955, 2
          %s2959 = smul.addr %s24, 32
          %s2960 = sadd.s32 %s2958, %s2959
          %s2961 = smul.addr %s2960, 4
          %s2962 = scalar_lea.hbm %s6, %s2961
          %s2963 = sshll.u32 %s2951, 4
          %s2964 = int_to_ptr.vmem [resolvable:$true] %s2963
          %s2965 = sshll.u32 %s2962, 4
          %s2966 = int_to_ptr.hbm [resolvable:$true] %s2965
          %2971 = dma.vmem_to_hbm [thread:$0]  %s2964, 1024, %s2966, %s2948, 64, 64, 4
        $region56: #{tpu_custom_call.1} parent=43 // pred_fallthru
          _
      $region44: #{tpu_custom_call.1} parent=5 // pred_fallthru
        _
      %p2972 = scmp.le.s32.totalorder 2, %s15
      // Predicated region
      $region57: #{tpu_custom_call.1} parent=5 // pred_check
        %p2973 = pneg %p2972
      $region58: #{tpu_custom_call.1} parent=5 // pred_check_branch
        %2975 = sbr.rel (%p2973) target = $region60
      $region59: #{tpu_custom_call.1} parent=5 // pred_region
        %s2976 = ssub.s32 %s15, 2
        // Predicated region
        $region61: #{tpu_custom_call.1} parent=59 // pred_check
          %p2977 = pneg %p189
        $region62: #{tpu_custom_call.1} parent=59 // pred_check_branch
          %2979 = sbr.rel (%p2977) target = $region64
        $region63: #{tpu_custom_call.1} parent=59 // pred_region
          %s2980 = sand.u32 %s174, 1
          %s2981 = scalar_lea.sflag [#allocation4], %s2980
          %s2982 = sand.u32 %s174, 1
          %s2983 = smul.addr %s2982, 64
          %s2984 = scalar_lea.vmem [#allocation3], %s2983
          %2986 = dma.done %s2981, 1024
        $region64: #{tpu_custom_call.1} parent=59 // pred_fallthru
          _
      $region60: #{tpu_custom_call.1} parent=5 // pred_fallthru
        _
    $region6: #{tpu_custom_call.1} parent=1 // loop_footer
      %s19 = sadd.s32 1, %s15
    $region7: #{tpu_custom_call.1} parent=1 // loop_footer_branch
      %14 = sbr.rel target = $region3
    $region8: #{tpu_custom_call.1} parent=1 // loop_exit
      _
    %2987 = vsyncpa [#allocation4], 1
    %s2988 = scalar_lea.sflag [#allocation4], 1
    %2989 = vsyncpa %s2988, 1

</llo_original>
